<compile_context>
chip_gen: v6e
topology: v6e:2x2x1
jax: 0.10.0
libtpu: 0.0.40
codegen_flags: <defaults>
</compile_context>

<pallas_src>
import jax
import jax.numpy as jnp
from jax.experimental import pallas as pl
from jax.experimental.pallas import tpu as pltpu

COMPUTE_DTYPE = jnp.bfloat16          # MXU operand dtype; all accumulation in f32
VMEM_LIMIT_BYTES = 64 * 1024 * 1024   # budget for v7x (64 MiB VMEM); fine on v5e/v6e
CONV_TILE_M = 512                     # >=512-row tiles ≈ 85% of HBM roofline
QHEAD_TILE_B = 128                    # batch tile for the fused fc/LN/Q kernel


def _round_up(x, m):
    return (x + m - 1) // m * m


# ----------------------------- Pallas kernels -----------------------------

def _conv_mm_kernel(x_ref, w_ref, b_ref, o_ref):
    # One M-tile of the im2col conv:  relu(patches @ w + b), f32 accumulation.
    acc = jnp.dot(x_ref[...].astype(COMPUTE_DTYPE), w_ref[...],
                  preferred_element_type=jnp.float32)
    acc = jnp.maximum(acc + b_ref[...], 0.0)
    o_ref[...] = acc.astype(o_ref.dtype)


def _encoder_q_kernel(h_ref, a_ref,
                      fcw_ref, fcb_ref, g_ref, beta_ref,
                      w1o1, w1a1, b11, w21, b21, w31, b31,
                      w1o2, w1a2, b12, w22, b22, w32, b32,
                      q1_ref, q2_ref):
    # Fused: fc -> LayerNorm -> (concat with action via split W1) -> Q1, Q2.
    h = h_ref[...]                              # (TB, conv_flat) bf16
    act = a_ref[...].astype(COMPUTE_DTYPE)      # (TB, A)

    # fc + LayerNorm (torch eps=1e-5, biased variance), stats in f32.
    z = jnp.dot(h, fcw_ref[...], preferred_element_type=jnp.float32) + fcb_ref[...]
    mu = jnp.mean(z, axis=-1, keepdims=True)
    var = jnp.mean(jnp.square(z - mu), axis=-1, keepdims=True)
    feat = (z - mu) * jax.lax.rsqrt(var + 1e-5) * g_ref[...] + beta_ref[...]
    feat = feat.astype(COMPUTE_DTYPE)

    def q_head(w1o, w1a, b1, w2, b2, w3, b3):
        h1 = (jnp.dot(feat, w1o[...], preferred_element_type=jnp.float32)
              + jnp.dot(act, w1a[...], preferred_element_type=jnp.float32)
              + b1[...])
        h1 = jnp.maximum(h1, 0.0).astype(COMPUTE_DTYPE)
        h2 = jnp.dot(h1, w2[...], preferred_element_type=jnp.float32) + b2[...]
        h2 = jnp.maximum(h2, 0.0).astype(COMPUTE_DTYPE)
        return jnp.dot(h2, w3[...], preferred_element_type=jnp.float32) + b3[...]

    q1_ref[...] = q_head(w1o1, w1a1, b11, w21, b21, w31, b31).astype(q1_ref.dtype)
    q2_ref[...] = q_head(w1o2, w1a2, b12, w22, b22, w32, b32).astype(q2_ref.dtype)


# --------------------------- Pallas call wrappers --------------------------

def conv_as_matmul(patches, w_flat, b2):
    """relu(patches @ w + b): patches (M, 9*Cin), w (9*Cin, Cout), b2 (1, Cout).

    Tiled over M with a parallel grid axis so Pallas double-buffers the
    patch DMAs; weights/bias stay VMEM-resident across grid steps.
    """
    M, K = patches.shape
    N = w_flat.shape[1]
    m32 = _round_up(M, 32)
    if m32 >= CONV_TILE_M:
        tm = CONV_TILE_M
        m_pad = _round_up(M, CONV_TILE_M)
    else:
        tm, m_pad = m32, m32
    if m_pad != M:
        patches = jnp.pad(patches, ((0, m_pad - M), (0, 0)))
    out = pl.pallas_call(
        _conv_mm_kernel,
        grid=(m_pad // tm,),
        out_shape=jax.ShapeDtypeStruct((m_pad, N), COMPUTE_DTYPE),
        in_specs=[pl.BlockSpec((tm, K), lambda i: (i, 0)),
                  pl.BlockSpec((K, N), lambda i: (0, 0)),
                  pl.BlockSpec((1, N), lambda i: (0, 0))],
        out_specs=pl.BlockSpec((tm, N), lambda i: (i, 0)),
        compiler_params=pltpu.CompilerParams(
            dimension_semantics=("parallel",),
            vmem_limit_bytes=VMEM_LIMIT_BYTES),
    )(patches, w_flat, b2)
    return out[:M]


def fused_encoder_q(h_flat, action, enc, q1p, q2p):
    """Fused fc+LayerNorm+Q1+Q2 on (B, conv_flat) features and (B, A) actions."""
    B, K = h_flat.shape
    A = action.shape[1]
    if B <= QHEAD_TILE_B:
        tb, b_pad = B, B
    else:
        tb = QHEAD_TILE_B
        b_pad = _round_up(B, tb)
        if b_pad != B:
            h_flat = jnp.pad(h_flat, ((0, b_pad - B), (0, 0)))
            action = jnp.pad(action, ((0, b_pad - B), (0, 0)))

    def tiled(n):   # batch-tiled activations
        return pl.BlockSpec((tb, n), lambda i: (i, 0))

    def full(shape):  # grid-invariant (VMEM-resident) parameters
        return pl.BlockSpec(shape, lambda i: (0, 0))

    args = [h_flat, action, enc["fc_w"], enc["fc_b"], enc["ln_g"], enc["ln_b"]]
    in_specs = [tiled(K), tiled(A), full(enc["fc_w"].shape),
                full(enc["fc_b"].shape), full(enc["ln_g"].shape),
                full(enc["ln_b"].shape)]
    for head in (q1p, q2p):
        for name in ("w1o", "w1a", "b1", "w2", "b2", "w3", "b3"):
            v = head[name]
            args.append(v)
            in_specs.append(full(v.shape))

    q1, q2 = pl.pallas_call(
        _encoder_q_kernel,
        grid=(b_pad // tb,),
        out_shape=(jax.ShapeDtypeStruct((b_pad, 1), jnp.float32),
                   jax.ShapeDtypeStruct((b_pad, 1), jnp.float32)),
        in_specs=in_specs,
        out_specs=(pl.BlockSpec((tb, 1), lambda i: (i, 0)),
                   pl.BlockSpec((tb, 1), lambda i: (i, 0))),
        compiler_params=pltpu.CompilerParams(
            dimension_semantics=("parallel",),
            vmem_limit_bytes=VMEM_LIMIT_BYTES),
    )(*args)
    return q1[:B], q2[:B]


# ------------------------------- JAX glue ----------------------------------

def _im2col(x, k, stride):
    """x: (N, H, W, C) -> (N*Ho*Wo, k*k*C) patches in (kh, kw, cin) order."""
    N, H, W, C = x.shape
    Ho = (H - k) // stride + 1
    Wo = (W - k) // stride + 1
    cols = []
    for dy in range(k):
        for dx in range(k):
            cols.append(x[:, dy::stride, dx::stride, :][:, :Ho, :Wo, :])
    p = jnp.stack(cols, axis=3)                      # (N, Ho, Wo, k*k, C)
    return p.reshape(N * Ho * Wo, k * k * C), Ho, Wo


def critic_forward(params, obs, action):
    """obs: (B, C, H, W) float32 in [0, 255]; action: (B, A)."""
    x = obs.astype(jnp.float32) / 255.0              # PixelEncoder preprocess
    x = jnp.transpose(x, (0, 2, 3, 1)).astype(COMPUTE_DTYPE)   # NCHW -> NHWC
    B = x.shape[0]

    for layer in params["convs"]:                    # conv = im2col + matmul
        patches, Ho, Wo = _im2col(x, 3, layer["stride"])
        y = conv_as_matmul(patches, layer["w"], layer["b"])
        x = y.reshape(B, Ho, Wo, layer["w"].shape[1])

    # NHWC flatten — the torch NCHW flatten order is folded into fc_w columns.
    h = x.reshape(B, -1)
    return fused_encoder_q(h, action.astype(jnp.float32),
                           params["enc"], params["q1"], params["q2"])


# ----------------------- parameter init & one-time layout -------------------

def _orthogonal(key, rows, cols, gain=1.0):
    n = max(rows, cols)
    a = jax.random.normal(key, (n, n), dtype=jnp.float32)
    q, r = jnp.linalg.qr(a)
    q = q * jnp.sign(jnp.diagonal(r))
    return gain * q[:rows, :cols]


def init_torch_params(key, obs_shape, action_shape, hidden_dim,
                      encoder_feature_dim, num_layers, num_filters):
    """Parameters in the PyTorch layout / init (weight_init of the module)."""
    C, H, W = obs_shape
    A = action_shape[0]
    gain_relu = jnp.sqrt(2.0)
    keys = iter(jax.random.split(key, 32))

    convs = []
    h, w_sp, cin = H, W, C
    for i in range(num_layers):
        stride = 2 if i == 0 else 1
        cout = num_filters
        wk = jnp.zeros((cout, cin, 3, 3), jnp.float32)
        wk = wk.at[:, :, 1, 1].set(_orthogonal(next(keys), cout, cin, gain=gain_relu))
        convs.append((wk, jnp.zeros((cout,), jnp.float32), stride))
        h = (h - 3) // stride + 1
        w_sp = (w_sp - 3) // stride + 1
        cin = cout
    conv_flat = num_filters * h * w_sp

    fc_w = _orthogonal(next(keys), encoder_feature_dim, conv_flat)   # (out, in)
    fc_b = jnp.zeros((encoder_feature_dim,), jnp.float32)
    ln_g = jnp.ones((encoder_feature_dim,), jnp.float32)
    ln_b = jnp.zeros((encoder_feature_dim,), jnp.float32)

    def q_head():
        in_dim = encoder_feature_dim + A
        return [(_orthogonal(next(keys), hidden_dim, in_dim),
                 jnp.zeros((hidden_dim,), jnp.float32)),
                (_orthogonal(next(keys), hidden_dim, hidden_dim),
                 jnp.zeros((hidden_dim,), jnp.float32)),
                (_orthogonal(next(keys), 1, hidden_dim),
                 jnp.zeros((1,), jnp.float32))]

    return {"convs": convs, "fc_w": fc_w, "fc_b": fc_b, "ln_g": ln_g,
            "ln_b": ln_b, "q1": q_head(), "q2": q_head(),
            "conv_out_hw": (h, w_sp), "feature_dim": encoder_feature_dim}


def prepare_params(tp):
    """One-time layout for the kernels: pre-transposed bf16 weights, (1,n) f32
    biases, and the torch NCHW-flatten folded into the fc weight columns."""
    convs = []
    for (w, b, stride) in tp["convs"]:
        cout = w.shape[0]
        w_flat = jnp.transpose(w, (2, 3, 1, 0)).reshape(-1, cout)   # (kh,kw,cin)->rows
        convs.append({"w": w_flat.astype(COMPUTE_DTYPE),
                      "b": b.reshape(1, -1).astype(jnp.float32),
                      "stride": stride})

    ho, wo = tp["conv_out_hw"]
    cout = tp["convs"][-1][0].shape[0]
    feat_dim = tp["feature_dim"]
    fc_w = tp["fc_w"].reshape(feat_dim, cout, ho, wo)               # (out,c,h,w)
    fc_w = jnp.transpose(fc_w, (2, 3, 1, 0)).reshape(ho * wo * cout, feat_dim)
    enc = {"fc_w": fc_w.astype(COMPUTE_DTYPE),
           "fc_b": tp["fc_b"].reshape(1, -1).astype(jnp.float32),
           "ln_g": tp["ln_g"].reshape(1, -1).astype(jnp.float32),
           "ln_b": tp["ln_b"].reshape(1, -1).astype(jnp.float32)}

    def prep_q(head):
        (w1, b1), (w2, b2), (w3, b3) = head
        w1t = jnp.transpose(w1)                                     # (in, hidden)
        return {"w1o": w1t[:feat_dim].astype(COMPUTE_DTYPE),
                "w1a": w1t[feat_dim:].astype(COMPUTE_DTYPE),
                "b1": b1.reshape(1, -1).astype(jnp.float32),
                "w2": jnp.transpose(w2).astype(COMPUTE_DTYPE),
                "b2": b2.reshape(1, -1).astype(jnp.float32),
                "w3": jnp.transpose(w3).astype(COMPUTE_DTYPE),
                "b3": b3.reshape(1, -1).astype(jnp.float32)}

    return {"convs": convs, "enc": enc,
            "q1": prep_q(tp["q1"]), "q2": prep_q(tp["q2"])}


# --------------------- precision-mirrored pure-JAX reference ----------------

def reference_forward(tp, obs, action):
    cd = COMPUTE_DTYPE
    x = (obs.astype(jnp.float32) / 255.0).astype(cd)
    for (w, b, stride) in tp["convs"]:
        y = jax.lax.conv_general_dilated(
            x, w.astype(cd), (stride, stride), "VALID",
            dimension_numbers=("NCHW", "OIHW", "NCHW"),
            preferred_element_type=jnp.float32)
        x = jnp.maximum(y + b.reshape(1, -1, 1, 1), 0.0).astype(cd)
    h = x.reshape(x.shape[0], -1)                                   # NCHW flatten
    z = jnp.dot(h, tp["fc_w"].T.astype(cd),
                preferred_element_type=jnp.float32) + tp["fc_b"]
    mu = jnp.mean(z, axis=-1, keepdims=True)
    var = jnp.mean(jnp.square(z - mu), axis=-1, keepdims=True)
    feat = ((z - mu) * jax.lax.rsqrt(var + 1e-5) * tp["ln_g"] + tp["ln_b"]).astype(cd)
    oa = jnp.concatenate([feat, action.astype(jnp.float32).astype(cd)], axis=1)

    def q(head):
        (w1, b1), (w2, b2), (w3, b3) = head
        h1 = jnp.dot(oa, w1.T.astype(cd), preferred_element_type=jnp.float32) + b1
        h1 = jnp.maximum(h1, 0.0).astype(cd)
        h2 = jnp.dot(h1, w2.T.astype(cd), preferred_element_type=jnp.float32) + b2
        h2 = jnp.maximum(h2, 0.0).astype(cd)
        return jnp.dot(h2, w3.T.astype(cd), preferred_element_type=jnp.float32) + b3

    return q(tp["q1"]), q(tp["q2"])


# ---------------------------------- main ------------------------------------

if __name__ == "__main__":
    obs_shape = (3, 16, 16)          # (C, H, W)
    action_shape = (4,)
    hidden_dim = 32
    encoder_feature_dim = 32
    num_layers = 2
    num_filters = 8
    batch = 2

    key = jax.random.PRNGKey(0)
    kp, ko, ka = jax.random.split(key, 3)

    torch_params = init_torch_params(kp, obs_shape, action_shape, hidden_dim,
                                     encoder_feature_dim, num_layers, num_filters)
    params = prepare_params(torch_params)            # one-time weight layout

    obs = jax.random.uniform(ko, (batch,) + obs_shape,
                             dtype=jnp.float32, minval=0.0, maxval=255.0)
    action = jax.random.uniform(ka, (batch, action_shape[0]),
                                dtype=jnp.float32, minval=-1.0, maxval=1.0)

    fwd = jax.jit(lambda o, a: critic_forward(params, o, a))
    q1, q2 = fwd(obs, action)
    jax.block_until_ready((q1, q2))

    assert q1.shape == (batch, 1) and q2.shape == (batch, 1)
    assert q1.dtype == jnp.float32 and q2.dtype == jnp.float32
    assert bool(jnp.all(jnp.isfinite(q1))) and bool(jnp.all(jnp.isfinite(q2)))

    r1, r2 = reference_forward(torch_params, obs, action)
    assert bool(jnp.allclose(q1, r1, atol=5e-2, rtol=5e-2))
    assert bool(jnp.allclose(q2, r2, atol=5e-2, rtol=5e-2))

    print("KERNEL_OK")
</pallas_src>

<mosaic_0001>
module attributes {stable_mosaic.version = 11 : i64} {
  func.func @_conv_mm_kernel(%arg0: i32, %arg1: memref<128x27xbf16, #tpu.memory_space<vmem>>, %arg2: memref<27x8xbf16, #tpu.memory_space<vmem>>, %arg3: memref<1x8xf32, #tpu.memory_space<vmem>>, %arg4: memref<128x8xbf16, #tpu.memory_space<vmem>>) attributes {dimension_semantics = [#tpu.dimension_semantics<parallel>], iteration_bounds = array<i64: 1>, scalar_prefetch = 0 : i64, scratch_operands = 0 : i64, tpu.core_type = #tpu.core_type<tc>, window_params = [{transform_indices = @transform_0, window_bounds = array<i64: 128, 27>}, {pipeline_mode = #tpu.pipeline_mode<synchronous>, transform_indices = @transform_1, window_bounds = array<i64: 27, 8>}, {pipeline_mode = #tpu.pipeline_mode<synchronous>, transform_indices = @transform_2, window_bounds = array<i64: 1, 8>}, {transform_indices = @transform_3, window_bounds = array<i64: 128, 8>}]} {
    %c0 = arith.constant 0 : index
    %c0_0 = arith.constant 0 : index
    %0 = vector.load %arg1[%c0, %c0_0] : memref<128x27xbf16, #tpu.memory_space<vmem>>, vector<128x27xbf16>
    %c0_1 = arith.constant 0 : index
    %c0_2 = arith.constant 0 : index
    %1 = vector.load %arg2[%c0_1, %c0_2] : memref<27x8xbf16, #tpu.memory_space<vmem>>, vector<27x8xbf16>
    %cst = arith.constant dense<0.000000e+00> : vector<128x8xf32>
    %2 = tpu.matmul %0, %1, %cst {dimension_numbers = #tpu.dot_dimension_numbers<[1], [0], [0], [1], [0, 0, 1, 1], [], []>} : vector<128x27xbf16>, vector<27x8xbf16>, vector<128x8xf32> -> vector<128x8xf32>
    %c0_3 = arith.constant 0 : index
    %c0_4 = arith.constant 0 : index
    %3 = vector.load %arg3[%c0_3, %c0_4] : memref<1x8xf32, #tpu.memory_space<vmem>>, vector<1x8xf32>
    %4 = vector.broadcast %3 : vector<1x8xf32> to vector<128x8xf32>
    %5 = arith.addf %2, %4 : vector<128x8xf32>
    %cst_5 = arith.constant 0.000000e+00 : f32
    %6 = vector.broadcast %cst_5 : f32 to vector<128x8xf32>
    %7 = arith.maximumf %5, %6 : vector<128x8xf32>
    %8 = arith.truncf %7 : vector<128x8xf32> to vector<128x8xbf16>
    %c0_6 = arith.constant 0 : index
    %c0_7 = arith.constant 0 : index
    %9 = vector.load %arg4[%c0_6, %c0_7] : memref<128x8xbf16, #tpu.memory_space<vmem>>, vector<128x8xbf16>
    tpu.vector_store %arg4[%c0_6, %c0_7], %8 {strides = array<i32>} : memref<128x8xbf16, #tpu.memory_space<vmem>>, vector<128x8xbf16>,
    return
  }
  func.func @transform_0(%arg0: i32) -> (i32, i32) {
    %c0_i32 = arith.constant 0 : i32
    %c0_i32_0 = arith.constant 0 : i32
    return %arg0, %c0_i32 : i32, i32
  }
  func.func @transform_1(%arg0: i32) -> (i32, i32) {
    %c0_i32 = arith.constant 0 : i32
    %c0_i32_0 = arith.constant 0 : i32
    %c0_i32_1 = arith.constant 0 : i32
    return %c0_i32, %c0_i32_0 : i32, i32
  }
  func.func @transform_2(%arg0: i32) -> (i32, i32) {
    %c0_i32 = arith.constant 0 : i32
    %c0_i32_0 = arith.constant 0 : i32
    %c0_i32_1 = arith.constant 0 : i32
    return %c0_i32, %c0_i32_0 : i32, i32
  }
  func.func @transform_3(%arg0: i32) -> (i32, i32) {
    %c0_i32 = arith.constant 0 : i32
    %c0_i32_0 = arith.constant 0 : i32
    return %arg0, %c0_i32 : i32, i32
  }
}

module attributes {stable_mosaic.version = 11 : i64} {
  func.func @_conv_mm_kernel(%arg0: i32, %arg1: memref<64x72xbf16, #tpu.memory_space<vmem>>, %arg2: memref<72x8xbf16, #tpu.memory_space<vmem>>, %arg3: memref<1x8xf32, #tpu.memory_space<vmem>>, %arg4: memref<64x8xbf16, #tpu.memory_space<vmem>>) attributes {dimension_semantics = [#tpu.dimension_semantics<parallel>], iteration_bounds = array<i64: 1>, scalar_prefetch = 0 : i64, scratch_operands = 0 : i64, tpu.core_type = #tpu.core_type<tc>, window_params = [{transform_indices = @transform_0, window_bounds = array<i64: 64, 72>}, {pipeline_mode = #tpu.pipeline_mode<synchronous>, transform_indices = @transform_1, window_bounds = array<i64: 72, 8>}, {pipeline_mode = #tpu.pipeline_mode<synchronous>, transform_indices = @transform_2, window_bounds = array<i64: 1, 8>}, {transform_indices = @transform_3, window_bounds = array<i64: 64, 8>}]} {
    %c0 = arith.constant 0 : index
    %c0_0 = arith.constant 0 : index
    %0 = vector.load %arg1[%c0, %c0_0] : memref<64x72xbf16, #tpu.memory_space<vmem>>, vector<64x72xbf16>
    %c0_1 = arith.constant 0 : index
    %c0_2 = arith.constant 0 : index
    %1 = vector.load %arg2[%c0_1, %c0_2] : memref<72x8xbf16, #tpu.memory_space<vmem>>, vector<72x8xbf16>
    %cst = arith.constant dense<0.000000e+00> : vector<64x8xf32>
    %2 = tpu.matmul %0, %1, %cst {dimension_numbers = #tpu.dot_dimension_numbers<[1], [0], [0], [1], [0, 0, 1, 1], [], []>} : vector<64x72xbf16>, vector<72x8xbf16>, vector<64x8xf32> -> vector<64x8xf32>
    %c0_3 = arith.constant 0 : index
    %c0_4 = arith.constant 0 : index
    %3 = vector.load %arg3[%c0_3, %c0_4] : memref<1x8xf32, #tpu.memory_space<vmem>>, vector<1x8xf32>
    %4 = vector.broadcast %3 : vector<1x8xf32> to vector<64x8xf32>
    %5 = arith.addf %2, %4 : vector<64x8xf32>
    %cst_5 = arith.constant 0.000000e+00 : f32
    %6 = vector.broadcast %cst_5 : f32 to vector<64x8xf32>
    %7 = arith.maximumf %5, %6 : vector<64x8xf32>
    %8 = arith.truncf %7 : vector<64x8xf32> to vector<64x8xbf16>
    %c0_6 = arith.constant 0 : index
    %c0_7 = arith.constant 0 : index
    %9 = vector.load %arg4[%c0_6, %c0_7] : memref<64x8xbf16, #tpu.memory_space<vmem>>, vector<64x8xbf16>
    tpu.vector_store %arg4[%c0_6, %c0_7], %8 {strides = array<i32>} : memref<64x8xbf16, #tpu.memory_space<vmem>>, vector<64x8xbf16>,
    return
  }
  func.func @transform_0(%arg0: i32) -> (i32, i32) {
    %c0_i32 = arith.constant 0 : i32
    %c0_i32_0 = arith.constant 0 : i32
    return %arg0, %c0_i32 : i32, i32
  }
  func.func @transform_1(%arg0: i32) -> (i32, i32) {
    %c0_i32 = arith.constant 0 : i32
    %c0_i32_0 = arith.constant 0 : i32
    %c0_i32_1 = arith.constant 0 : i32
    return %c0_i32, %c0_i32_0 : i32, i32
  }
  func.func @transform_2(%arg0: i32) -> (i32, i32) {
    %c0_i32 = arith.constant 0 : i32
    %c0_i32_0 = arith.constant 0 : i32
    %c0_i32_1 = arith.constant 0 : i32
    return %c0_i32, %c0_i32_0 : i32, i32
  }
  func.func @transform_3(%arg0: i32) -> (i32, i32) {
    %c0_i32 = arith.constant 0 : i32
    %c0_i32_0 = arith.constant 0 : i32
    return %arg0, %c0_i32 : i32, i32
  }
}

module attributes {stable_mosaic.version = 11 : i64} {
  func.func @_encoder_q_kernel(%arg0: i32, %arg1: memref<2x200xbf16, #tpu.memory_space<vmem>>, %arg2: memref<2x4xf32, #tpu.memory_space<vmem>>, %arg3: memref<200x32xbf16, #tpu.memory_space<vmem>>, %arg4: memref<1x32xf32, #tpu.memory_space<vmem>>, %arg5: memref<1x32xf32, #tpu.memory_space<vmem>>, %arg6: memref<1x32xf32, #tpu.memory_space<vmem>>, %arg7: memref<32x32xbf16, #tpu.memory_space<vmem>>, %arg8: memref<4x32xbf16, #tpu.memory_space<vmem>>, %arg9: memref<1x32xf32, #tpu.memory_space<vmem>>, %arg10: memref<32x32xbf16, #tpu.memory_space<vmem>>, %arg11: memref<1x32xf32, #tpu.memory_space<vmem>>, %arg12: memref<32x1xbf16, #tpu.memory_space<vmem>>, %arg13: memref<1x1xf32, #tpu.memory_space<vmem>>, %arg14: memref<32x32xbf16, #tpu.memory_space<vmem>>, %arg15: memref<4x32xbf16, #tpu.memory_space<vmem>>, %arg16: memref<1x32xf32, #tpu.memory_space<vmem>>, %arg17: memref<32x32xbf16, #tpu.memory_space<vmem>>, %arg18: memref<1x32xf32, #tpu.memory_space<vmem>>, %arg19: memref<32x1xbf16, #tpu.memory_space<vmem>>, %arg20: memref<1x1xf32, #tpu.memory_space<vmem>>, %arg21: memref<2x1xf32, #tpu.memory_space<vmem>>, %arg22: memref<2x1xf32, #tpu.memory_space<vmem>>) attributes {dimension_semantics = [#tpu.dimension_semantics<parallel>], iteration_bounds = array<i64: 1>, scalar_prefetch = 0 : i64, scratch_operands = 0 : i64, tpu.core_type = #tpu.core_type<tc>, window_params = [{transform_indices = @transform_0, window_bounds = array<i64: 2, 200>}, {transform_indices = @transform_1, window_bounds = array<i64: 2, 4>}, {pipeline_mode = #tpu.pipeline_mode<synchronous>, transform_indices = @transform_2, window_bounds = array<i64: 200, 32>}, {pipeline_mode = #tpu.pipeline_mode<synchronous>, transform_indices = @transform_3, window_bounds = array<i64: 1, 32>}, {pipeline_mode = #tpu.pipeline_mode<synchronous>, transform_indices = @transform_4, window_bounds = array<i64: 1, 32>}, {pipeline_mode = #tpu.pipeline_mode<synchronous>, transform_indices = @transform_5, window_bounds = array<i64: 1, 32>}, {pipeline_mode = #tpu.pipeline_mode<synchronous>, transform_indices = @transform_6, window_bounds = array<i64: 32, 32>}, {pipeline_mode = #tpu.pipeline_mode<synchronous>, transform_indices = @transform_7, window_bounds = array<i64: 4, 32>}, {pipeline_mode = #tpu.pipeline_mode<synchronous>, transform_indices = @transform_8, window_bounds = array<i64: 1, 32>}, {pipeline_mode = #tpu.pipeline_mode<synchronous>, transform_indices = @transform_9, window_bounds = array<i64: 32, 32>}, {pipeline_mode = #tpu.pipeline_mode<synchronous>, transform_indices = @transform_10, window_bounds = array<i64: 1, 32>}, {pipeline_mode = #tpu.pipeline_mode<synchronous>, transform_indices = @transform_11, window_bounds = array<i64: 32, 1>}, {pipeline_mode = #tpu.pipeline_mode<synchronous>, transform_indices = @transform_12, window_bounds = array<i64: 1, 1>}, {pipeline_mode = #tpu.pipeline_mode<synchronous>, transform_indices = @transform_13, window_bounds = array<i64: 32, 32>}, {pipeline_mode = #tpu.pipeline_mode<synchronous>, transform_indices = @transform_14, window_bounds = array<i64: 4, 32>}, {pipeline_mode = #tpu.pipeline_mode<synchronous>, transform_indices = @transform_15, window_bounds = array<i64: 1, 32>}, {pipeline_mode = #tpu.pipeline_mode<synchronous>, transform_indices = @transform_16, window_bounds = array<i64: 32, 32>}, {pipeline_mode = #tpu.pipeline_mode<synchronous>, transform_indices = @transform_17, window_bounds = array<i64: 1, 32>}, {pipeline_mode = #tpu.pipeline_mode<synchronous>, transform_indices = @transform_18, window_bounds = array<i64: 32, 1>}, {pipeline_mode = #tpu.pipeline_mode<synchronous>, transform_indices = @transform_19, window_bounds = array<i64: 1, 1>}, {transform_indices = @transform_20, window_bounds = array<i64: 2, 1>}, {transform_indices = @transform_21, window_bounds = array<i64: 2, 1>}]} {
    %c0 = arith.constant 0 : index
    %c0_0 = arith.constant 0 : index
    %0 = vector.load %arg1[%c0, %c0_0] : memref<2x200xbf16, #tpu.memory_space<vmem>>, vector<2x200xbf16>
    %c0_1 = arith.constant 0 : index
    %c0_2 = arith.constant 0 : index
    %1 = vector.load %arg2[%c0_1, %c0_2] : memref<2x4xf32, #tpu.memory_space<vmem>>, vector<2x4xf32>
    %2 = arith.truncf %1 : vector<2x4xf32> to vector<2x4xbf16>
    %c0_3 = arith.constant 0 : index
    %c0_4 = arith.constant 0 : index
    %3 = vector.load %arg3[%c0_3, %c0_4] : memref<200x32xbf16, #tpu.memory_space<vmem>>, vector<200x32xbf16>
    %cst = arith.constant dense<0.000000e+00> : vector<2x32xf32>
    %4 = tpu.matmul %0, %3, %cst {dimension_numbers = #tpu.dot_dimension_numbers<[1], [0], [0], [1], [0, 0, 1, 1], [], []>} : vector<2x200xbf16>, vector<200x32xbf16>, vector<2x32xf32> -> vector<2x32xf32>
    %c0_5 = arith.constant 0 : index
    %c0_6 = arith.constant 0 : index
    %5 = vector.load %arg4[%c0_5, %c0_6] : memref<1x32xf32, #tpu.memory_space<vmem>>, vector<1x32xf32>
    %6 = vector.broadcast %5 : vector<1x32xf32> to vector<2x32xf32>
    %7 = arith.addf %4, %6 : vector<2x32xf32>
    %cst_7 = arith.constant dense<0.000000e+00> : vector<2xf32>
    %8 = vector.multi_reduction <add>, %7, %cst_7 [1] : vector<2x32xf32> to vector<2xf32>
    %9 = vector.shape_cast %8 : vector<2xf32> to vector<2x1xf32>
    %cst_8 = arith.constant 3.200000e+01 : f32
    %10 = vector.broadcast %cst_8 : f32 to vector<2x1xf32>
    %11 = arith.divf %9, %10 : vector<2x1xf32>
    %12 = vector.broadcast %11 : vector<2x1xf32> to vector<2x32xf32>
    %13 = arith.subf %7, %12 : vector<2x32xf32>
    %14 = arith.mulf %13, %13 : vector<2x32xf32>
    %cst_9 = arith.constant dense<0.000000e+00> : vector<2xf32>
    %15 = vector.multi_reduction <add>, %14, %cst_9 [1] : vector<2x32xf32> to vector<2xf32>
    %16 = vector.shape_cast %15 : vector<2xf32> to vector<2x1xf32>
    %cst_10 = arith.constant 3.200000e+01 : f32
    %17 = vector.broadcast %cst_10 : f32 to vector<2x1xf32>
    %18 = arith.divf %16, %17 : vector<2x1xf32>
    %19 = vector.broadcast %11 : vector<2x1xf32> to vector<2x32xf32>
    %20 = arith.subf %7, %19 : vector<2x32xf32>
    %cst_11 = arith.constant 9.99999974E-6 : f32
    %21 = vector.broadcast %cst_11 : f32 to vector<2x1xf32>
    %22 = arith.addf %18, %21 : vector<2x1xf32>
    %23 = math.rsqrt %22 : vector<2x1xf32>
    %24 = vector.broadcast %23 : vector<2x1xf32> to vector<2x32xf32>
    %25 = arith.mulf %20, %24 : vector<2x32xf32>
    %c0_12 = arith.constant 0 : index
    %c0_13 = arith.constant 0 : index
    %26 = vector.load %arg5[%c0_12, %c0_13] : memref<1x32xf32, #tpu.memory_space<vmem>>, vector<1x32xf32>
    %27 = vector.broadcast %26 : vector<1x32xf32> to vector<2x32xf32>
    %28 = arith.mulf %25, %27 : vector<2x32xf32>
    %c0_14 = arith.constant 0 : index
    %c0_15 = arith.constant 0 : index
    %29 = vector.load %arg6[%c0_14, %c0_15] : memref<1x32xf32, #tpu.memory_space<vmem>>, vector<1x32xf32>
    %30 = vector.broadcast %29 : vector<1x32xf32> to vector<2x32xf32>
    %31 = arith.addf %28, %30 : vector<2x32xf32>
    %32 = arith.truncf %31 : vector<2x32xf32> to vector<2x32xbf16>
    %c0_16 = arith.constant 0 : index
    %c0_17 = arith.constant 0 : index
    %33 = vector.load %arg7[%c0_16, %c0_17] : memref<32x32xbf16, #tpu.memory_space<vmem>>, vector<32x32xbf16>
    %cst_18 = arith.constant dense<0.000000e+00> : vector<2x32xf32>
    %34 = tpu.matmul %32, %33, %cst_18 {dimension_numbers = #tpu.dot_dimension_numbers<[1], [0], [0], [1], [0, 0, 1, 1], [], []>} : vector<2x32xbf16>, vector<32x32xbf16>, vector<2x32xf32> -> vector<2x32xf32>
    %c0_19 = arith.constant 0 : index
    %c0_20 = arith.constant 0 : index
    %35 = vector.load %arg8[%c0_19, %c0_20] : memref<4x32xbf16, #tpu.memory_space<vmem>>, vector<4x32xbf16>
    %cst_21 = arith.constant dense<0.000000e+00> : vector<2x32xf32>
    %36 = tpu.matmul %2, %35, %cst_21 {dimension_numbers = #tpu.dot_dimension_numbers<[1], [0], [0], [1], [0, 0, 1, 1], [], []>} : vector<2x4xbf16>, vector<4x32xbf16>, vector<2x32xf32> -> vector<2x32xf32>
    %37 = arith.addf %34, %36 : vector<2x32xf32>
    %c0_22 = arith.constant 0 : index
    %c0_23 = arith.constant 0 : index
    %38 = vector.load %arg9[%c0_22, %c0_23] : memref<1x32xf32, #tpu.memory_space<vmem>>, vector<1x32xf32>
    %39 = vector.broadcast %38 : vector<1x32xf32> to vector<2x32xf32>
    %40 = arith.addf %37, %39 : vector<2x32xf32>
    %cst_24 = arith.constant 0.000000e+00 : f32
    %41 = vector.broadcast %cst_24 : f32 to vector<2x32xf32>
    %42 = arith.maximumf %40, %41 : vector<2x32xf32>
    %43 = arith.truncf %42 : vector<2x32xf32> to vector<2x32xbf16>
    %c0_25 = arith.constant 0 : index
    %c0_26 = arith.constant 0 : index
    %44 = vector.load %arg10[%c0_25, %c0_26] : memref<32x32xbf16, #tpu.memory_space<vmem>>, vector<32x32xbf16>
    %cst_27 = arith.constant dense<0.000000e+00> : vector<2x32xf32>
    %45 = tpu.matmul %43, %44, %cst_27 {dimension_numbers = #tpu.dot_dimension_numbers<[1], [0], [0], [1], [0, 0, 1, 1], [], []>} : vector<2x32xbf16>, vector<32x32xbf16>, vector<2x32xf32> -> vector<2x32xf32>
    %c0_28 = arith.constant 0 : index
    %c0_29 = arith.constant 0 : index
    %46 = vector.load %arg11[%c0_28, %c0_29] : memref<1x32xf32, #tpu.memory_space<vmem>>, vector<1x32xf32>
    %47 = vector.broadcast %46 : vector<1x32xf32> to vector<2x32xf32>
    %48 = arith.addf %45, %47 : vector<2x32xf32>
    %cst_30 = arith.constant 0.000000e+00 : f32
    %49 = vector.broadcast %cst_30 : f32 to vector<2x32xf32>
    %50 = arith.maximumf %48, %49 : vector<2x32xf32>
    %51 = arith.truncf %50 : vector<2x32xf32> to vector<2x32xbf16>
    %c0_31 = arith.constant 0 : index
    %c0_32 = arith.constant 0 : index
    %52 = vector.load %arg12[%c0_31, %c0_32] : memref<32x1xbf16, #tpu.memory_space<vmem>>, vector<32x1xbf16>
    %cst_33 = arith.constant dense<0.000000e+00> : vector<2x1xf32>
    %53 = tpu.matmul %51, %52, %cst_33 {dimension_numbers = #tpu.dot_dimension_numbers<[1], [0], [0], [1], [0, 0, 1, 1], [], []>} : vector<2x32xbf16>, vector<32x1xbf16>, vector<2x1xf32> -> vector<2x1xf32>
    %c0_34 = arith.constant 0 : index
    %c0_35 = arith.constant 0 : index
    %54 = vector.load %arg13[%c0_34, %c0_35] : memref<1x1xf32, #tpu.memory_space<vmem>>, vector<1x1xf32>
    %55 = vector.broadcast %54 : vector<1x1xf32> to vector<2x1xf32>
    %56 = arith.addf %53, %55 : vector<2x1xf32>
    %c0_36 = arith.constant 0 : index
    %c0_37 = arith.constant 0 : index
    %57 = vector.load %arg21[%c0_36, %c0_37] : memref<2x1xf32, #tpu.memory_space<vmem>>, vector<2x1xf32>
    tpu.vector_store %arg21[%c0_36, %c0_37], %56 {strides = array<i32>} : memref<2x1xf32, #tpu.memory_space<vmem>>, vector<2x1xf32>,
    %c0_38 = arith.constant 0 : index
    %c0_39 = arith.constant 0 : index
    %58 = vector.load %arg14[%c0_38, %c0_39] : memref<32x32xbf16, #tpu.memory_space<vmem>>, vector<32x32xbf16>
    %cst_40 = arith.constant dense<0.000000e+00> : vector<2x32xf32>
    %59 = tpu.matmul %32, %58, %cst_40 {dimension_numbers = #tpu.dot_dimension_numbers<[1], [0], [0], [1], [0, 0, 1, 1], [], []>} : vector<2x32xbf16>, vector<32x32xbf16>, vector<2x32xf32> -> vector<2x32xf32>
    %c0_41 = arith.constant 0 : index
    %c0_42 = arith.constant 0 : index
    %60 = vector.load %arg15[%c0_41, %c0_42] : memref<4x32xbf16, #tpu.memory_space<vmem>>, vector<4x32xbf16>
    %cst_43 = arith.constant dense<0.000000e+00> : vector<2x32xf32>
    %61 = tpu.matmul %2, %60, %cst_43 {dimension_numbers = #tpu.dot_dimension_numbers<[1], [0], [0], [1], [0, 0, 1, 1], [], []>} : vector<2x4xbf16>, vector<4x32xbf16>, vector<2x32xf32> -> vector<2x32xf32>
    %62 = arith.addf %59, %61 : vector<2x32xf32>
    %c0_44 = arith.constant 0 : index
    %c0_45 = arith.constant 0 : index
    %63 = vector.load %arg16[%c0_44, %c0_45] : memref<1x32xf32, #tpu.memory_space<vmem>>, vector<1x32xf32>
    %64 = vector.broadcast %63 : vector<1x32xf32> to vector<2x32xf32>
    %65 = arith.addf %62, %64 : vector<2x32xf32>
    %cst_46 = arith.constant 0.000000e+00 : f32
    %66 = vector.broadcast %cst_46 : f32 to vector<2x32xf32>
    %67 = arith.maximumf %65, %66 : vector<2x32xf32>
    %68 = arith.truncf %67 : vector<2x32xf32> to vector<2x32xbf16>
    %c0_47 = arith.constant 0 : index
    %c0_48 = arith.constant 0 : index
    %69 = vector.load %arg17[%c0_47, %c0_48] : memref<32x32xbf16, #tpu.memory_space<vmem>>, vector<32x32xbf16>
    %cst_49 = arith.constant dense<0.000000e+00> : vector<2x32xf32>
    %70 = tpu.matmul %68, %69, %cst_49 {dimension_numbers = #tpu.dot_dimension_numbers<[1], [0], [0], [1], [0, 0, 1, 1], [], []>} : vector<2x32xbf16>, vector<32x32xbf16>, vector<2x32xf32> -> vector<2x32xf32>
    %c0_50 = arith.constant 0 : index
    %c0_51 = arith.constant 0 : index
    %71 = vector.load %arg18[%c0_50, %c0_51] : memref<1x32xf32, #tpu.memory_space<vmem>>, vector<1x32xf32>
    %72 = vector.broadcast %71 : vector<1x32xf32> to vector<2x32xf32>
    %73 = arith.addf %70, %72 : vector<2x32xf32>
    %cst_52 = arith.constant 0.000000e+00 : f32
    %74 = vector.broadcast %cst_52 : f32 to vector<2x32xf32>
    %75 = arith.maximumf %73, %74 : vector<2x32xf32>
    %76 = arith.truncf %75 : vector<2x32xf32> to vector<2x32xbf16>
    %c0_53 = arith.constant 0 : index
    %c0_54 = arith.constant 0 : index
    %77 = vector.load %arg19[%c0_53, %c0_54] : memref<32x1xbf16, #tpu.memory_space<vmem>>, vector<32x1xbf16>
    %cst_55 = arith.constant dense<0.000000e+00> : vector<2x1xf32>
    %78 = tpu.matmul %76, %77, %cst_55 {dimension_numbers = #tpu.dot_dimension_numbers<[1], [0], [0], [1], [0, 0, 1, 1], [], []>} : vector<2x32xbf16>, vector<32x1xbf16>, vector<2x1xf32> -> vector<2x1xf32>
    %c0_56 = arith.constant 0 : index
    %c0_57 = arith.constant 0 : index
    %79 = vector.load %arg20[%c0_56, %c0_57] : memref<1x1xf32, #tpu.memory_space<vmem>>, vector<1x1xf32>
    %80 = vector.broadcast %79 : vector<1x1xf32> to vector<2x1xf32>
    %81 = arith.addf %78, %80 : vector<2x1xf32>
    %c0_58 = arith.constant 0 : index
    %c0_59 = arith.constant 0 : index
    %82 = vector.load %arg22[%c0_58, %c0_59] : memref<2x1xf32, #tpu.memory_space<vmem>>, vector<2x1xf32>
    tpu.vector_store %arg22[%c0_58, %c0_59], %81 {strides = array<i32>} : memref<2x1xf32, #tpu.memory_space<vmem>>, vector<2x1xf32>,
    return
  }
  func.func @transform_0(%arg0: i32) -> (i32, i32) {
    %c0_i32 = arith.constant 0 : i32
    %c0_i32_0 = arith.constant 0 : i32
    return %arg0, %c0_i32 : i32, i32
  }
  func.func @transform_1(%arg0: i32) -> (i32, i32) {
    %c0_i32 = arith.constant 0 : i32
    %c0_i32_0 = arith.constant 0 : i32
    return %arg0, %c0_i32 : i32, i32
  }
  func.func @transform_2(%arg0: i32) -> (i32, i32) {
    %c0_i32 = arith.constant 0 : i32
    %c0_i32_0 = arith.constant 0 : i32
    %c0_i32_1 = arith.constant 0 : i32
    return %c0_i32, %c0_i32_0 : i32, i32
  }
  func.func @transform_3(%arg0: i32) -> (i32, i32) {
    %c0_i32 = arith.constant 0 : i32
    %c0_i32_0 = arith.constant 0 : i32
    %c0_i32_1 = arith.constant 0 : i32
    return %c0_i32, %c0_i32_0 : i32, i32
  }
  func.func @transform_4(%arg0: i32) -> (i32, i32) {
    %c0_i32 = arith.constant 0 : i32
    %c0_i32_0 = arith.constant 0 : i32
    %c0_i32_1 = arith.constant 0 : i32
    return %c0_i32, %c0_i32_0 : i32, i32
  }
  func.func @transform_5(%arg0: i32) -> (i32, i32) {
    %c0_i32 = arith.constant 0 : i32
    %c0_i32_0 = arith.constant 0 : i32
    %c0_i32_1 = arith.constant 0 : i32
    return %c0_i32, %c0_i32_0 : i32, i32
  }
  func.func @transform_6(%arg0: i32) -> (i32, i32) {
    %c0_i32 = arith.constant 0 : i32
    %c0_i32_0 = arith.constant 0 : i32
    %c0_i32_1 = arith.constant 0 : i32
    return %c0_i32, %c0_i32_0 : i32, i32
  }
  func.func @transform_7(%arg0: i32) -> (i32, i32) {
    %c0_i32 = arith.constant 0 : i32
    %c0_i32_0 = arith.constant 0 : i32
    %c0_i32_1 = arith.constant 0 : i32
    return %c0_i32, %c0_i32_0 : i32, i32
  }
  func.func @transform_8(%arg0: i32) -> (i32, i32) {
    %c0_i32 = arith.constant 0 : i32
    %c0_i32_0 = arith.constant 0 : i32
    %c0_i32_1 = arith.constant 0 : i32
    return %c0_i32, %c0_i32_0 : i32, i32
  }
  func.func @transform_9(%arg0: i32) -> (i32, i32) {
    %c0_i32 = arith.constant 0 : i32
    %c0_i32_0 = arith.constant 0 : i32
    %c0_i32_1 = arith.constant 0 : i32
    return %c0_i32, %c0_i32_0 : i32, i32
  }
  func.func @transform_10(%arg0: i32) -> (i32, i32) {
    %c0_i32 = arith.constant 0 : i32
    %c0_i32_0 = arith.constant 0 : i32
    %c0_i32_1 = arith.constant 0 : i32
    return %c0_i32, %c0_i32_0 : i32, i32
  }
  func.func @transform_11(%arg0: i32) -> (i32, i32) {
    %c0_i32 = arith.constant 0 : i32
    %c0_i32_0 = arith.constant 0 : i32
    %c0_i32_1 = arith.constant 0 : i32
    return %c0_i32, %c0_i32_0 : i32, i32
  }
  func.func @transform_12(%arg0: i32) -> (i32, i32) {
    %c0_i32 = arith.constant 0 : i32
    %c0_i32_0 = arith.constant 0 : i32
    %c0_i32_1 = arith.constant 0 : i32
    return %c0_i32, %c0_i32_0 : i32, i32
  }
  func.func @transform_13(%arg0: i32) -> (i32, i32) {
    %c0_i32 = arith.constant 0 : i32
    %c0_i32_0 = arith.constant 0 : i32
    %c0_i32_1 = arith.constant 0 : i32
    return %c0_i32, %c0_i32_0 : i32, i32
  }
  func.func @transform_14(%arg0: i32) -> (i32, i32) {
    %c0_i32 = arith.constant 0 : i32
    %c0_i32_0 = arith.constant 0 : i32
    %c0_i32_1 = arith.constant 0 : i32
    return %c0_i32, %c0_i32_0 : i32, i32
  }
  func.func @transform_15(%arg0: i32) -> (i32, i32) {
    %c0_i32 = arith.constant 0 : i32
    %c0_i32_0 = arith.constant 0 : i32
    %c0_i32_1 = arith.constant 0 : i32
    return %c0_i32, %c0_i32_0 : i32, i32
  }
  func.func @transform_16(%arg0: i32) -> (i32, i32) {
    %c0_i32 = arith.constant 0 : i32
    %c0_i32_0 = arith.constant 0 : i32
    %c0_i32_1 = arith.constant 0 : i32
    return %c0_i32, %c0_i32_0 : i32, i32
  }
  func.func @transform_17(%arg0: i32) -> (i32, i32) {
    %c0_i32 = arith.constant 0 : i32
    %c0_i32_0 = arith.constant 0 : i32
    %c0_i32_1 = arith.constant 0 : i32
    return %c0_i32, %c0_i32_0 : i32, i32
  }
  func.func @transform_18(%arg0: i32) -> (i32, i32) {
    %c0_i32 = arith.constant 0 : i32
    %c0_i32_0 = arith.constant 0 : i32
    %c0_i32_1 = arith.constant 0 : i32
    return %c0_i32, %c0_i32_0 : i32, i32
  }
  func.func @transform_19(%arg0: i32) -> (i32, i32) {
    %c0_i32 = arith.constant 0 : i32
    %c0_i32_0 = arith.constant 0 : i32
    %c0_i32_1 = arith.constant 0 : i32
    return %c0_i32, %c0_i32_0 : i32, i32
  }
  func.func @transform_20(%arg0: i32) -> (i32, i32) {
    %c0_i32 = arith.constant 0 : i32
    %c0_i32_0 = arith.constant 0 : i32
    return %arg0, %c0_i32 : i32, i32
  }
  func.func @transform_21(%arg0: i32) -> (i32, i32) {
    %c0_i32 = arith.constant 0 : i32
    %c0_i32_0 = arith.constant 0 : i32
    return %arg0, %c0_i32 : i32, i32
  }
}

</mosaic_0001>

<llo_original>
// kernel: _lambda_.3
$region0: #{_lambda_.3}
  #allocation0 [shape = 'u32[]', space=smem, size = 0x4, offset = 0x4, fixed_abs, tag = 'smem constant byte address 0x4 - core index']
  #allocation1 [shape = 'u32[144,128]{1,0:T(1,128)}', space=vmem, size = 0x12000, scoped, tag = 'internal scratch']
  %s0 = inlined_call_operand.vmem [shape: bf16[128,27], index: 0, kind: input, shape index: {}]
  %s1 = inlined_call_operand.vmem [shape: bf16[27,8], index: 1, kind: input, shape index: {}]
  %s2 = inlined_call_operand.vmem [shape: f32[1,8], index: 2, kind: input, shape index: {}]
  %s3 = inlined_call_operand.vmem [shape: bf16[128,8], index: 3, kind: output, shape index: {}]
  %s4 = sld [smem:[#allocation0]]
  $region22: #{_lambda_.3} parent=0
    _
  %s6 = ssub.s32 1, %s4
  %s7 = scalar_select 0, %s6, %s4
  // Predicated region
  $region2: #{_lambda_.3} parent=0 // pred_check
    _
  $region3: #{_lambda_.3} parent=0 // pred_check_branch
    %9 = sbr.rel (0) target = $region5
  $region4: #{_lambda_.3} parent=0 // pred_region
    _
  $region5: #{_lambda_.3} parent=0 // pred_fallthru
    _
  // Predicated region
  $region6: #{_lambda_.3} parent=0 // pred_check
    _
  $region7: #{_lambda_.3} parent=0 // pred_check_branch
    %11 = sbr.rel (0) target = $region9
  $region8: #{_lambda_.3} parent=0 // pred_region
    _
  $region9: #{_lambda_.3} parent=0 // pred_fallthru
    _
  // Predicated region
  $region10: #{_lambda_.3} parent=0 // pred_check
    _
  $region11: #{_lambda_.3} parent=0 // pred_check_branch
    %13 = sbr.rel (0) target = $region13
  $region12: #{_lambda_.3} parent=0 // pred_region
    _
  $region13: #{_lambda_.3} parent=0 // pred_fallthru
    _
  %v15 = vld [vmem:[%s0] sm:$0xf]
  %v16 = vld [vmem:[%s0 + $0x4] sm:$0xf]
  %v17 = vld [vmem:[%s0 + $0x8] sm:$0xf]
  %v18 = vld [vmem:[%s0 + $0xc] sm:$0xf]
  %v19 = vld [vmem:[%s0 + $0x10] sm:$0xf]
  %v20 = vld [vmem:[%s0 + $0x14] sm:$0xf]
  %v21 = vld [vmem:[%s0 + $0x18] sm:$0xf]
  %v22 = vld [vmem:[%s0 + $0x1c] sm:$0xf]
  %v23 = vld [vmem:[%s0 + $0x20] sm:$0xf]
  %v24 = vld [vmem:[%s0 + $0x24] sm:$0xf]
  %v25 = vld [vmem:[%s0 + $0x28] sm:$0xf]
  %v26 = vld [vmem:[%s0 + $0x2c] sm:$0xf]
  %v27 = vld [vmem:[%s0 + $0x30] sm:$0xf]
  %v28 = vld [vmem:[%s0 + $0x34] sm:$0xf]
  %v29 = vld [vmem:[%s0 + $0x38] sm:$0xf]
  %v30 = vld [vmem:[%s0 + $0x3c] sm:$0xf]
  %v31 = vld [vmem:[%s1] sm:$0xf]
  %v32 = vld [vmem:[%s1 + $0x4] sm:$0xf]
  %v33 = vld [vmem:[%s1 + $0x8] sm:$0xf]
  %v34 = vld [vmem:[%s1 + $0xc] sm:$0x3]
  %v35 = vld [vmem:[%s2] sm:$0x1]
  %v37 = vlaneseq
  %v38 = vshrl.u32 %v37, 7
  %v39 = vsub.s32 0, %v38
  %v40 = vrot.slane %v35, %v39
  %v58 = vunpack.c.l.b16 %v15
  %v59 = vunpack.c.l.b16 %v16
  %v60 = vunpack.c.l.b16 %v17
  %v61 = vunpack.c.l.b16 %v18
  %v62 = vunpack.c.l.b16 %v19
  %v63 = vunpack.c.l.b16 %v20
  %v64 = vunpack.c.l.b16 %v21
  %v65 = vunpack.c.l.b16 %v22
  %v66 = vunpack.c.l.b16 %v23
  %v67 = vunpack.c.l.b16 %v24
  %v68 = vunpack.c.l.b16 %v25
  %v69 = vunpack.c.l.b16 %v26
  %v70 = vunpack.c.l.b16 %v27
  %v71 = vunpack.c.l.b16 %v28
  %v72 = vunpack.c.l.b16 %v29
  %v73 = vunpack.c.l.b16 %v30
  %v74 = vpack.c.b16 %v59, %v58
  %v75 = vpack.c.b16 %v61, %v60
  %v76 = vpack.c.b16 %v63, %v62
  %v77 = vpack.c.b16 %v65, %v64
  %v78 = vpack.c.b16 %v67, %v66
  %v79 = vpack.c.b16 %v69, %v68
  %v80 = vpack.c.b16 %v71, %v70
  %v81 = vpack.c.b16 %v73, %v72
  %v86 = vunpack.c.l.b16 %v31
  %v87 = vunpack.c.l.b16 %v32
  %v88 = vunpack.c.l.b16 %v33
  %v89 = vunpack.c.l.b16 %v34
  %v90 = vpack.c.b16 %v87, %v86
  %v91 = vpack.c.b16 %v89, %v88
  %vm93 = vcmask 220160
  %v95 = vsel %vm93, %v74, 0
  %v98 = vsel %vm93, %v75, 0
  %v101 = vsel %vm93, %v76, 0
  %v104 = vsel %vm93, %v77, 0
  %v107 = vsel %vm93, %v78, 0
  %v110 = vsel %vm93, %v79, 0
  %v113 = vsel %vm93, %v80, 0
  %v116 = vsel %vm93, %v81, 0
  %vm118 = vcmask 1044480
  %vm119 = vcmask 1045504
  %v120 = vsel %vm118, 4294967295, 65535
  %v121 = vsel %vm119, %v120, 0
  %v123 = vand.u32 %v91, %v121
  %125 = vmatprep.subr.bf16.mxu0 0
  %126 = vmatpush1.bf16.msra.mxu0 0
  %127 = vmatprep.subr.bf16.mxu0 0
  %128 = vmatpush1.bf16.msra.mxu0 0
  %129 = vmatprep.subr.bf16.mxu0 0
  %130 = vmatpush1.bf16.msra.mxu0 0
  %131 = vmatprep.subr.bf16.mxu0 0
  %132 = vmatpush1.bf16.msra.mxu0 0
  %133 = vmatprep.subr.bf16.mxu0 0
  %134 = vmatpush1.bf16.msra.mxu0 0
  %135 = vmatprep.subr.bf16.mxu0 0
  %136 = vmatpush1.bf16.msra.mxu0 0
  %137 = vmatprep.subr.bf16.mxu0 0
  %138 = vmatpush1.bf16.msra.mxu0 %v123
  %139 = vmatprep.subr.bf16.mxu0 0
  %140 = vmatpush1.bf16.msra.mxu0 %v90
  %141 = vmatprep.subr.bf16.mxu0 0
  %142 = vmatpush2.bf16.msra.mxu0 0
  %143 = vmatprep.subr.bf16.mxu0 0
  %144 = vmatpush2.bf16.msra.mxu0 0
  %145 = vmatprep.subr.bf16.mxu0 0
  %146 = vmatpush2.bf16.msra.mxu0 0
  %147 = vmatprep.subr.bf16.mxu0 0
  %148 = vmatpush2.bf16.msra.mxu0 0
  %149 = vmatprep.subr.bf16.mxu0 0
  %150 = vmatpush2.bf16.msra.mxu0 0
  %151 = vmatprep.subr.bf16.mxu0 0
  %152 = vmatpush2.bf16.msra.mxu0 0
  %153 = vmatprep.subr.bf16.mxu0 0
  %154 = vmatpush2.bf16.msra.mxu0 0
  %155 = vmatprep.subr.bf16.mxu0 0
  %156 = vmatpush2.bf16.msra.mxu0 0
  %157 = vmatprep.mubr.bf16.mxu0 0
  %158 = vmatmul.mubr.bf16.gmra.mxu0 %v95
  %v159 = vpop.f32.mrf.mxu0
  %v160 = vadd.f32 %v40, %v159
  %v161 = vpop.f32.mrf.mxu0
  %v162 = vpop.f32.mrf.mxu0
  %v163 = vadd.f32 %v40, %v162
  %v164 = vpop.f32.mrf.mxu0
  %165 = vmatprep.mubr.bf16.mxu0 0
  %166 = vmatmul.mubr.bf16.gmra.mxu0 %v98
  %v167 = vpop.f32.mrf.mxu0
  %v168 = vadd.f32 %v40, %v167
  %v169 = vpop.f32.mrf.mxu0
  %v170 = vpop.f32.mrf.mxu0
  %v171 = vadd.f32 %v40, %v170
  %v172 = vpop.f32.mrf.mxu0
  %173 = vmatprep.mubr.bf16.mxu0 0
  %174 = vmatmul.mubr.bf16.gmra.mxu0 %v101
  %v175 = vpop.f32.mrf.mxu0
  %v176 = vadd.f32 %v40, %v175
  %v177 = vpop.f32.mrf.mxu0
  %v178 = vpop.f32.mrf.mxu0
  %v179 = vadd.f32 %v40, %v178
  %v180 = vpop.f32.mrf.mxu0
  %181 = vmatprep.mubr.bf16.mxu0 0
  %182 = vmatmul.mubr.bf16.gmra.mxu0 %v104
  %v183 = vpop.f32.mrf.mxu0
  %v184 = vadd.f32 %v40, %v183
  %v185 = vpop.f32.mrf.mxu0
  %v186 = vpop.f32.mrf.mxu0
  %v187 = vadd.f32 %v40, %v186
  %v188 = vpop.f32.mrf.mxu0
  %189 = vmatprep.mubr.bf16.mxu0 0
  %190 = vmatmul.mubr.bf16.gmra.mxu0 %v107
  %v191 = vpop.f32.mrf.mxu0
  %v192 = vadd.f32 %v40, %v191
  %v193 = vpop.f32.mrf.mxu0
  %v194 = vpop.f32.mrf.mxu0
  %v195 = vadd.f32 %v40, %v194
  %v196 = vpop.f32.mrf.mxu0
  %197 = vmatprep.mubr.bf16.mxu0 0
  %198 = vmatmul.mubr.bf16.gmra.mxu0 %v110
  %v199 = vpop.f32.mrf.mxu0
  %v200 = vadd.f32 %v40, %v199
  %v201 = vpop.f32.mrf.mxu0
  %v202 = vpop.f32.mrf.mxu0
  %v203 = vadd.f32 %v40, %v202
  %v204 = vpop.f32.mrf.mxu0
  %205 = vmatprep.mubr.bf16.mxu0 0
  %206 = vmatmul.mubr.bf16.gmra.mxu0 %v113
  %v207 = vpop.f32.mrf.mxu0
  %v208 = vadd.f32 %v40, %v207
  %v209 = vpop.f32.mrf.mxu0
  %v210 = vpop.f32.mrf.mxu0
  %v211 = vadd.f32 %v40, %v210
  %v212 = vpop.f32.mrf.mxu0
  %213 = vmatprep.mubr.bf16.mxu0 0
  %214 = vmatmul.mubr.bf16.gmra.mxu0 %v116
  %v215 = vpop.f32.mrf.mxu0
  %v216 = vadd.f32 %v40, %v215
  %v217 = vpop.f32.mrf.mxu0
  %v218 = vpop.f32.mrf.mxu0
  %v219 = vadd.f32 %v40, %v218
  %v220 = vpop.f32.mrf.mxu0
  %221 = vdwg.mxu0
  %v222 = vmax.f32 %v160, 0.0
  %v223 = vmax.f32 %v163, 0.0
  %v224 = vmax.f32 %v168, 0.0
  %v225 = vmax.f32 %v171, 0.0
  %v226 = vmax.f32 %v176, 0.0
  %v227 = vmax.f32 %v179, 0.0
  %v228 = vmax.f32 %v184, 0.0
  %v229 = vmax.f32 %v187, 0.0
  %v230 = vmax.f32 %v192, 0.0
  %v231 = vmax.f32 %v195, 0.0
  %v232 = vmax.f32 %v200, 0.0
  %v233 = vmax.f32 %v203, 0.0
  %v234 = vmax.f32 %v208, 0.0
  %v235 = vmax.f32 %v211, 0.0
  %v236 = vmax.f32 %v216, 0.0
  %v237 = vmax.f32 %v219, 0.0
  %v238 = vpack.c.bf16 %v223, %v222
  %v239 = vpack.c.bf16 %v225, %v224
  %v240 = vpack.c.bf16 %v227, %v226
  %v241 = vpack.c.bf16 %v229, %v228
  %v242 = vpack.c.bf16 %v231, %v230
  %v243 = vpack.c.bf16 %v233, %v232
  %v244 = vpack.c.bf16 %v235, %v234
  %v245 = vpack.c.bf16 %v237, %v236
  %v254 = vunpack.c.l.b16 %v238
  %v255 = vunpack.c.h.b16 %v238
  %v256 = vunpack.c.l.b16 %v239
  %v257 = vunpack.c.h.b16 %v239
  %v258 = vunpack.c.l.b16 %v240
  %v259 = vunpack.c.h.b16 %v240
  %v260 = vunpack.c.l.b16 %v241
  %v261 = vunpack.c.h.b16 %v241
  %v262 = vunpack.c.l.b16 %v242
  %v263 = vunpack.c.h.b16 %v242
  %v264 = vunpack.c.l.b16 %v243
  %v265 = vunpack.c.h.b16 %v243
  %v266 = vunpack.c.l.b16 %v244
  %v267 = vunpack.c.h.b16 %v244
  %v268 = vunpack.c.l.b16 %v245
  %v269 = vunpack.c.h.b16 %v245
  %v270 = vpack.c.b16 %v254, %v254
  %v271 = vpack.c.b16 %v255, %v255
  %v272 = vpack.c.b16 %v256, %v256
  %v273 = vpack.c.b16 %v257, %v257
  %v274 = vpack.c.b16 %v258, %v258
  %v275 = vpack.c.b16 %v259, %v259
  %v276 = vpack.c.b16 %v260, %v260
  %v277 = vpack.c.b16 %v261, %v261
  %v278 = vpack.c.b16 %v262, %v262
  %v279 = vpack.c.b16 %v263, %v263
  %v280 = vpack.c.b16 %v264, %v264
  %v281 = vpack.c.b16 %v265, %v265
  %v282 = vpack.c.b16 %v266, %v266
  %v283 = vpack.c.b16 %v267, %v267
  %v284 = vpack.c.b16 %v268, %v268
  %v285 = vpack.c.b16 %v269, %v269
  %vm302 = vcmask 60416
  %303 = vst.msk [vmem:[%s3] sm:$0xf] %vm302, %v270
  %304 = vst.msk [vmem:[%s3 + $0x4] sm:$0xf] %vm302, %v271
  %305 = vst.msk [vmem:[%s3 + $0x8] sm:$0xf] %vm302, %v272
  %306 = vst.msk [vmem:[%s3 + $0xc] sm:$0xf] %vm302, %v273
  %307 = vst.msk [vmem:[%s3 + $0x10] sm:$0xf] %vm302, %v274
  %308 = vst.msk [vmem:[%s3 + $0x14] sm:$0xf] %vm302, %v275
  %309 = vst.msk [vmem:[%s3 + $0x18] sm:$0xf] %vm302, %v276
  %310 = vst.msk [vmem:[%s3 + $0x1c] sm:$0xf] %vm302, %v277
  %311 = vst.msk [vmem:[%s3 + $0x20] sm:$0xf] %vm302, %v278
  %312 = vst.msk [vmem:[%s3 + $0x24] sm:$0xf] %vm302, %v279
  %313 = vst.msk [vmem:[%s3 + $0x28] sm:$0xf] %vm302, %v280
  %314 = vst.msk [vmem:[%s3 + $0x2c] sm:$0xf] %vm302, %v281
  %315 = vst.msk [vmem:[%s3 + $0x30] sm:$0xf] %vm302, %v282
  %316 = vst.msk [vmem:[%s3 + $0x34] sm:$0xf] %vm302, %v283
  %317 = vst.msk [vmem:[%s3 + $0x38] sm:$0xf] %vm302, %v284
  %318 = vst.msk [vmem:[%s3 + $0x3c] sm:$0xf] %vm302, %v285
  // Predicated region
  $region14: #{_lambda_.3} parent=0 // pred_check
    _
  $region15: #{_lambda_.3} parent=0 // pred_check_branch
    %320 = sbr.rel (0) target = $region17
  $region16: #{_lambda_.3} parent=0 // pred_region
    _
  $region17: #{_lambda_.3} parent=0 // pred_fallthru
    _
  // Predicated region
  $region18: #{_lambda_.3} parent=0 // pred_check
    _
  $region19: #{_lambda_.3} parent=0 // pred_check_branch
    %322 = sbr.rel (0) target = $region21
  $region20: #{_lambda_.3} parent=0 // pred_region
    _
  $region21: #{_lambda_.3} parent=0 // pred_fallthru
    _

// kernel: _lambda_.4
$region0: #{_lambda_.4}
  #allocation0 [shape = 'u32[]', space=smem, size = 0x4, offset = 0x4, fixed_abs, tag = 'smem constant byte address 0x4 - core index']
  #allocation1 [shape = 'u32[144,128]{1,0:T(1,128)}', space=vmem, size = 0x12000, scoped, tag = 'internal scratch']
  %s0 = inlined_call_operand.vmem [shape: bf16[64,72], index: 0, kind: input, shape index: {}]
  %s1 = inlined_call_operand.vmem [shape: bf16[72,8], index: 1, kind: input, shape index: {}]
  %s2 = inlined_call_operand.vmem [shape: f32[1,8], index: 2, kind: input, shape index: {}]
  %s3 = inlined_call_operand.vmem [shape: bf16[64,8], index: 3, kind: output, shape index: {}]
  %s4 = sld [smem:[#allocation0]]
  $region22: #{_lambda_.4} parent=0
    _
  %s6 = ssub.s32 1, %s4
  %s7 = scalar_select 0, %s6, %s4
  // Predicated region
  $region2: #{_lambda_.4} parent=0 // pred_check
    _
  $region3: #{_lambda_.4} parent=0 // pred_check_branch
    %9 = sbr.rel (0) target = $region5
  $region4: #{_lambda_.4} parent=0 // pred_region
    _
  $region5: #{_lambda_.4} parent=0 // pred_fallthru
    _
  // Predicated region
  $region6: #{_lambda_.4} parent=0 // pred_check
    _
  $region7: #{_lambda_.4} parent=0 // pred_check_branch
    %11 = sbr.rel (0) target = $region9
  $region8: #{_lambda_.4} parent=0 // pred_region
    _
  $region9: #{_lambda_.4} parent=0 // pred_fallthru
    _
  // Predicated region
  $region10: #{_lambda_.4} parent=0 // pred_check
    _
  $region11: #{_lambda_.4} parent=0 // pred_check_branch
    %13 = sbr.rel (0) target = $region13
  $region12: #{_lambda_.4} parent=0 // pred_region
    _
  $region13: #{_lambda_.4} parent=0 // pred_fallthru
    _
  %v15 = vld [vmem:[%s0] sm:$0xf]
  %v16 = vld [vmem:[%s0 + $0x4] sm:$0xf]
  %v17 = vld [vmem:[%s0 + $0x8] sm:$0xf]
  %v18 = vld [vmem:[%s0 + $0xc] sm:$0xf]
  %v19 = vld [vmem:[%s0 + $0x10] sm:$0xf]
  %v20 = vld [vmem:[%s0 + $0x14] sm:$0xf]
  %v21 = vld [vmem:[%s0 + $0x18] sm:$0xf]
  %v22 = vld [vmem:[%s0 + $0x1c] sm:$0xf]
  %v23 = vld [vmem:[%s1] sm:$0xf]
  %v24 = vld [vmem:[%s1 + $0x4] sm:$0xf]
  %v25 = vld [vmem:[%s1 + $0x8] sm:$0xf]
  %v26 = vld [vmem:[%s1 + $0xc] sm:$0xf]
  %v27 = vld [vmem:[%s1 + $0x10] sm:$0xf]
  %v28 = vld [vmem:[%s1 + $0x14] sm:$0xf]
  %v29 = vld [vmem:[%s1 + $0x18] sm:$0xf]
  %v30 = vld [vmem:[%s1 + $0x1c] sm:$0xf]
  %v31 = vld [vmem:[%s1 + $0x20] sm:$0xf]
  %v32 = vld [vmem:[%s2] sm:$0x1]
  %v34 = vlaneseq
  %v35 = vshrl.u32 %v34, 7
  %v36 = vsub.s32 0, %v35
  %v37 = vrot.slane %v32, %v36
  %v47 = vunpack.c.l.b16 %v15
  %v48 = vunpack.c.l.b16 %v16
  %v49 = vunpack.c.l.b16 %v17
  %v50 = vunpack.c.l.b16 %v18
  %v51 = vunpack.c.l.b16 %v19
  %v52 = vunpack.c.l.b16 %v20
  %v53 = vunpack.c.l.b16 %v21
  %v54 = vunpack.c.l.b16 %v22
  %v55 = vpack.c.b16 %v48, %v47
  %v56 = vpack.c.b16 %v50, %v49
  %v57 = vpack.c.b16 %v52, %v51
  %v58 = vpack.c.b16 %v54, %v53
  %v68 = vunpack.c.l.b16 %v23
  %v69 = vunpack.c.l.b16 %v24
  %v70 = vunpack.c.l.b16 %v25
  %v71 = vunpack.c.l.b16 %v26
  %v72 = vunpack.c.l.b16 %v27
  %v73 = vunpack.c.l.b16 %v28
  %v74 = vunpack.c.l.b16 %v29
  %v75 = vunpack.c.l.b16 %v30
  %v76 = vunpack.c.l.b16 %v31
  %v77 = vpack.c.b16 %v69, %v68
  %v78 = vpack.c.b16 %v71, %v70
  %v79 = vpack.c.b16 %v73, %v72
  %v80 = vpack.c.b16 %v75, %v74
  %v81 = vpack.c.b16 %v76, %v76
  %vm86 = vcmask 588800
  %v88 = vsel %vm86, %v55, 0
  %v91 = vsel %vm86, %v56, 0
  %v94 = vsel %vm86, %v57, 0
  %v97 = vsel %vm86, %v58, 0
  %vm99 = vcmask 1043456
  %v101 = vsel %vm99, %v81, 0
  %103 = vmatprep.subr.bf16.mxu0 0
  %104 = vmatpush1.bf16.msra.mxu0 0
  %105 = vmatprep.subr.bf16.mxu0 0
  %106 = vmatpush1.bf16.msra.mxu0 0
  %107 = vmatprep.subr.bf16.mxu0 0
  %108 = vmatpush1.bf16.msra.mxu0 0
  %109 = vmatprep.subr.bf16.mxu0 0
  %110 = vmatpush1.bf16.msra.mxu0 %v101
  %111 = vmatprep.subr.bf16.mxu0 0
  %112 = vmatpush1.bf16.msra.mxu0 %v80
  %113 = vmatprep.subr.bf16.mxu0 0
  %114 = vmatpush1.bf16.msra.mxu0 %v79
  %115 = vmatprep.subr.bf16.mxu0 0
  %116 = vmatpush1.bf16.msra.mxu0 %v78
  %117 = vmatprep.subr.bf16.mxu0 0
  %118 = vmatpush1.bf16.msra.mxu0 %v77
  %119 = vmatprep.subr.bf16.mxu0 0
  %120 = vmatpush2.bf16.msra.mxu0 0
  %121 = vmatprep.subr.bf16.mxu0 0
  %122 = vmatpush2.bf16.msra.mxu0 0
  %123 = vmatprep.subr.bf16.mxu0 0
  %124 = vmatpush2.bf16.msra.mxu0 0
  %125 = vmatprep.subr.bf16.mxu0 0
  %126 = vmatpush2.bf16.msra.mxu0 0
  %127 = vmatprep.subr.bf16.mxu0 0
  %128 = vmatpush2.bf16.msra.mxu0 0
  %129 = vmatprep.subr.bf16.mxu0 0
  %130 = vmatpush2.bf16.msra.mxu0 0
  %131 = vmatprep.subr.bf16.mxu0 0
  %132 = vmatpush2.bf16.msra.mxu0 0
  %133 = vmatprep.subr.bf16.mxu0 0
  %134 = vmatpush2.bf16.msra.mxu0 0
  %135 = vmatprep.mubr.bf16.mxu0 0
  %136 = vmatmul.mubr.bf16.gmra.mxu0 %v88
  %v137 = vpop.f32.mrf.mxu0
  %v138 = vadd.f32 %v37, %v137
  %v139 = vpop.f32.mrf.mxu0
  %v140 = vpop.f32.mrf.mxu0
  %v141 = vadd.f32 %v37, %v140
  %v142 = vpop.f32.mrf.mxu0
  %143 = vmatprep.mubr.bf16.mxu0 0
  %144 = vmatmul.mubr.bf16.gmra.mxu0 %v91
  %v145 = vpop.f32.mrf.mxu0
  %v146 = vadd.f32 %v37, %v145
  %v147 = vpop.f32.mrf.mxu0
  %v148 = vpop.f32.mrf.mxu0
  %v149 = vadd.f32 %v37, %v148
  %v150 = vpop.f32.mrf.mxu0
  %151 = vmatprep.mubr.bf16.mxu0 0
  %152 = vmatmul.mubr.bf16.gmra.mxu0 %v94
  %v153 = vpop.f32.mrf.mxu0
  %v154 = vadd.f32 %v37, %v153
  %v155 = vpop.f32.mrf.mxu0
  %v156 = vpop.f32.mrf.mxu0
  %v157 = vadd.f32 %v37, %v156
  %v158 = vpop.f32.mrf.mxu0
  %159 = vmatprep.mubr.bf16.mxu0 0
  %160 = vmatmul.mubr.bf16.gmra.mxu0 %v97
  %v161 = vpop.f32.mrf.mxu0
  %v162 = vadd.f32 %v37, %v161
  %v163 = vpop.f32.mrf.mxu0
  %v164 = vpop.f32.mrf.mxu0
  %v165 = vadd.f32 %v37, %v164
  %v166 = vpop.f32.mrf.mxu0
  %167 = vdwg.mxu0
  %v168 = vmax.f32 %v138, 0.0
  %v169 = vmax.f32 %v141, 0.0
  %v170 = vmax.f32 %v146, 0.0
  %v171 = vmax.f32 %v149, 0.0
  %v172 = vmax.f32 %v154, 0.0
  %v173 = vmax.f32 %v157, 0.0
  %v174 = vmax.f32 %v162, 0.0
  %v175 = vmax.f32 %v165, 0.0
  %v176 = vpack.c.bf16 %v169, %v168
  %v177 = vpack.c.bf16 %v171, %v170
  %v178 = vpack.c.bf16 %v173, %v172
  %v179 = vpack.c.bf16 %v175, %v174
  %v184 = vunpack.c.l.b16 %v176
  %v185 = vunpack.c.h.b16 %v176
  %v186 = vunpack.c.l.b16 %v177
  %v187 = vunpack.c.h.b16 %v177
  %v188 = vunpack.c.l.b16 %v178
  %v189 = vunpack.c.h.b16 %v178
  %v190 = vunpack.c.l.b16 %v179
  %v191 = vunpack.c.h.b16 %v179
  %v192 = vpack.c.b16 %v184, %v184
  %v193 = vpack.c.b16 %v185, %v185
  %v194 = vpack.c.b16 %v186, %v186
  %v195 = vpack.c.b16 %v187, %v187
  %v196 = vpack.c.b16 %v188, %v188
  %v197 = vpack.c.b16 %v189, %v189
  %v198 = vpack.c.b16 %v190, %v190
  %v199 = vpack.c.b16 %v191, %v191
  %vm208 = vcmask 60416
  %209 = vst.msk [vmem:[%s3] sm:$0xf] %vm208, %v192
  %210 = vst.msk [vmem:[%s3 + $0x4] sm:$0xf] %vm208, %v193
  %211 = vst.msk [vmem:[%s3 + $0x8] sm:$0xf] %vm208, %v194
  %212 = vst.msk [vmem:[%s3 + $0xc] sm:$0xf] %vm208, %v195
  %213 = vst.msk [vmem:[%s3 + $0x10] sm:$0xf] %vm208, %v196
  %214 = vst.msk [vmem:[%s3 + $0x14] sm:$0xf] %vm208, %v197
  %215 = vst.msk [vmem:[%s3 + $0x18] sm:$0xf] %vm208, %v198
  %216 = vst.msk [vmem:[%s3 + $0x1c] sm:$0xf] %vm208, %v199
  // Predicated region
  $region14: #{_lambda_.4} parent=0 // pred_check
    _
  $region15: #{_lambda_.4} parent=0 // pred_check_branch
    %218 = sbr.rel (0) target = $region17
  $region16: #{_lambda_.4} parent=0 // pred_region
    _
  $region17: #{_lambda_.4} parent=0 // pred_fallthru
    _
  // Predicated region
  $region18: #{_lambda_.4} parent=0 // pred_check
    _
  $region19: #{_lambda_.4} parent=0 // pred_check_branch
    %220 = sbr.rel (0) target = $region21
  $region20: #{_lambda_.4} parent=0 // pred_region
    _
  $region21: #{_lambda_.4} parent=0 // pred_fallthru
    _

// kernel: _lambda_.5
$region0: #{_lambda_.5}
  #allocation0 [shape = 'u32[]', space=smem, size = 0x4, offset = 0x4, fixed_abs, tag = 'smem constant byte address 0x4 - core index']
  #allocation1 [shape = 'u32[144,128]{1,0:T(1,128)}', space=vmem, size = 0x12000, scoped, tag = 'internal scratch']
  #allocation2 [shape = 'f32[1,1]{1,0:T(1,128)S(1)}', space=vmem, size = 0x200, scoped, tag = 'scoped memory for _lambda_.5']
  #allocation3 [shape = 'f32[1,1]{1,0:T(1,128)S(1)}', space=vmem, size = 0x200, scoped, tag = 'scoped memory for _lambda_.5']
  %s0 = inlined_call_operand.vmem [shape: bf16[2,200], index: 0, kind: input, shape index: {}]
  %s1 = inlined_call_operand.vmem [shape: f32[2,4], index: 1, kind: input, shape index: {}]
  %s2 = inlined_call_operand.vmem [shape: bf16[200,32], index: 2, kind: input, shape index: {}]
  %s3 = inlined_call_operand.vmem [shape: f32[1,32], index: 3, kind: input, shape index: {}, may-alias: {3,5,8,10,15,17}]
  %s4 = inlined_call_operand.vmem [shape: f32[1,32], index: 4, kind: input, shape index: {}]
  %s5 = inlined_call_operand.vmem [shape: f32[1,32], index: 5, kind: input, shape index: {}, may-alias: {3,5,8,10,15,17}]
  %s6 = inlined_call_operand.vmem [shape: bf16[32,32], index: 6, kind: input, shape index: {}]
  %s7 = inlined_call_operand.vmem [shape: bf16[4,32], index: 7, kind: input, shape index: {}]
  %s8 = inlined_call_operand.vmem [shape: f32[1,32], index: 8, kind: input, shape index: {}, may-alias: {3,5,8,10,15,17}]
  %s9 = inlined_call_operand.vmem [shape: bf16[32,32], index: 9, kind: input, shape index: {}]
  %s10 = inlined_call_operand.vmem [shape: f32[1,32], index: 10, kind: input, shape index: {}, may-alias: {3,5,8,10,15,17}]
  %s11 = inlined_call_operand.vmem [shape: bf16[32,1], index: 11, kind: input, shape index: {}]
  %s12 = inlined_call_operand.<no memory space> [shape: f32[1,1], index: 12, kind: input, shape index: {}, may-alias: {12,19}]
  %s13 = inlined_call_operand.vmem [shape: bf16[32,32], index: 13, kind: input, shape index: {}]
  %s14 = inlined_call_operand.vmem [shape: bf16[4,32], index: 14, kind: input, shape index: {}]
  %s15 = inlined_call_operand.vmem [shape: f32[1,32], index: 15, kind: input, shape index: {}, may-alias: {3,5,8,10,15,17}]
  %s16 = inlined_call_operand.vmem [shape: bf16[32,32], index: 16, kind: input, shape index: {}]
  %s17 = inlined_call_operand.vmem [shape: f32[1,32], index: 17, kind: input, shape index: {}, may-alias: {3,5,8,10,15,17}]
  %s18 = inlined_call_operand.vmem [shape: bf16[32,1], index: 18, kind: input, shape index: {}]
  %s19 = inlined_call_operand.<no memory space> [shape: f32[1,1], index: 19, kind: input, shape index: {}, may-alias: {12,19}]
  %s20 = inlined_call_operand.vmem [shape: f32[2,1], index: 20, kind: output, shape index: {0}]
  %s21 = inlined_call_operand.vmem [shape: f32[2,1], index: 21, kind: output, shape index: {1}]
  %22 = xla_tuple %s20, %s21
  %s23 = sld [smem:[#allocation0]]
  $region98: #{_lambda_.5} parent=0
    _
  %s25 = ssub.s32 1, %s23
  %s26 = scalar_select 0, %s25, %s23
  %v27 = vstv %s12
  %28 = vst [vmem:[#allocation2] sm:$0x1] %v27
  %v29 = vstv %s19
  %30 = vst [vmem:[#allocation3] sm:$0x1] %v29
  // Predicated region
  $region2: #{_lambda_.5} parent=0 // pred_check
    _
  $region3: #{_lambda_.5} parent=0 // pred_check_branch
    %32 = sbr.rel (0) target = $region5
  $region4: #{_lambda_.5} parent=0 // pred_region
    _
  $region5: #{_lambda_.5} parent=0 // pred_fallthru
    _
  // Predicated region
  $region6: #{_lambda_.5} parent=0 // pred_check
    _
  $region7: #{_lambda_.5} parent=0 // pred_check_branch
    %34 = sbr.rel (0) target = $region9
  $region8: #{_lambda_.5} parent=0 // pred_region
    _
  $region9: #{_lambda_.5} parent=0 // pred_fallthru
    _
  // Predicated region
  $region10: #{_lambda_.5} parent=0 // pred_check
    _
  $region11: #{_lambda_.5} parent=0 // pred_check_branch
    %36 = sbr.rel (0) target = $region13
  $region12: #{_lambda_.5} parent=0 // pred_region
    _
  $region13: #{_lambda_.5} parent=0 // pred_fallthru
    _
  // Predicated region
  $region14: #{_lambda_.5} parent=0 // pred_check
    _
  $region15: #{_lambda_.5} parent=0 // pred_check_branch
    %38 = sbr.rel (0) target = $region17
  $region16: #{_lambda_.5} parent=0 // pred_region
    _
  $region17: #{_lambda_.5} parent=0 // pred_fallthru
    _
  // Predicated region
  $region18: #{_lambda_.5} parent=0 // pred_check
    _
  $region19: #{_lambda_.5} parent=0 // pred_check_branch
    %40 = sbr.rel (0) target = $region21
  $region20: #{_lambda_.5} parent=0 // pred_region
    _
  $region21: #{_lambda_.5} parent=0 // pred_fallthru
    _
  // Predicated region
  $region22: #{_lambda_.5} parent=0 // pred_check
    _
  $region23: #{_lambda_.5} parent=0 // pred_check_branch
    %42 = sbr.rel (0) target = $region25
  $region24: #{_lambda_.5} parent=0 // pred_region
    _
  $region25: #{_lambda_.5} parent=0 // pred_fallthru
    _
  // Predicated region
  $region26: #{_lambda_.5} parent=0 // pred_check
    _
  $region27: #{_lambda_.5} parent=0 // pred_check_branch
    %44 = sbr.rel (0) target = $region29
  $region28: #{_lambda_.5} parent=0 // pred_region
    _
  $region29: #{_lambda_.5} parent=0 // pred_fallthru
    _
  // Predicated region
  $region30: #{_lambda_.5} parent=0 // pred_check
    _
  $region31: #{_lambda_.5} parent=0 // pred_check_branch
    %46 = sbr.rel (0) target = $region33
  $region32: #{_lambda_.5} parent=0 // pred_region
    _
  $region33: #{_lambda_.5} parent=0 // pred_fallthru
    _
  // Predicated region
  $region34: #{_lambda_.5} parent=0 // pred_check
    _
  $region35: #{_lambda_.5} parent=0 // pred_check_branch
    %48 = sbr.rel (0) target = $region37
  $region36: #{_lambda_.5} parent=0 // pred_region
    _
  $region37: #{_lambda_.5} parent=0 // pred_fallthru
    _
  // Predicated region
  $region38: #{_lambda_.5} parent=0 // pred_check
    _
  $region39: #{_lambda_.5} parent=0 // pred_check_branch
    %50 = sbr.rel (0) target = $region41
  $region40: #{_lambda_.5} parent=0 // pred_region
    _
  $region41: #{_lambda_.5} parent=0 // pred_fallthru
    _
  // Predicated region
  $region42: #{_lambda_.5} parent=0 // pred_check
    _
  $region43: #{_lambda_.5} parent=0 // pred_check_branch
    %52 = sbr.rel (0) target = $region45
  $region44: #{_lambda_.5} parent=0 // pred_region
    _
  $region45: #{_lambda_.5} parent=0 // pred_fallthru
    _
  // Predicated region
  $region46: #{_lambda_.5} parent=0 // pred_check
    _
  $region47: #{_lambda_.5} parent=0 // pred_check_branch
    %54 = sbr.rel (0) target = $region49
  $region48: #{_lambda_.5} parent=0 // pred_region
    _
  $region49: #{_lambda_.5} parent=0 // pred_fallthru
    _
  // Predicated region
  $region50: #{_lambda_.5} parent=0 // pred_check
    _
  $region51: #{_lambda_.5} parent=0 // pred_check_branch
    %56 = sbr.rel (0) target = $region53
  $region52: #{_lambda_.5} parent=0 // pred_region
    _
  $region53: #{_lambda_.5} parent=0 // pred_fallthru
    _
  // Predicated region
  $region54: #{_lambda_.5} parent=0 // pred_check
    _
  $region55: #{_lambda_.5} parent=0 // pred_check_branch
    %58 = sbr.rel (0) target = $region57
  $region56: #{_lambda_.5} parent=0 // pred_region
    _
  $region57: #{_lambda_.5} parent=0 // pred_fallthru
    _
  // Predicated region
  $region58: #{_lambda_.5} parent=0 // pred_check
    _
  $region59: #{_lambda_.5} parent=0 // pred_check_branch
    %60 = sbr.rel (0) target = $region61
  $region60: #{_lambda_.5} parent=0 // pred_region
    _
  $region61: #{_lambda_.5} parent=0 // pred_fallthru
    _
  // Predicated region
  $region62: #{_lambda_.5} parent=0 // pred_check
    _
  $region63: #{_lambda_.5} parent=0 // pred_check_branch
    %62 = sbr.rel (0) target = $region65
  $region64: #{_lambda_.5} parent=0 // pred_region
    _
  $region65: #{_lambda_.5} parent=0 // pred_fallthru
    _
  // Predicated region
  $region66: #{_lambda_.5} parent=0 // pred_check
    _
  $region67: #{_lambda_.5} parent=0 // pred_check_branch
    %64 = sbr.rel (0) target = $region69
  $region68: #{_lambda_.5} parent=0 // pred_region
    _
  $region69: #{_lambda_.5} parent=0 // pred_fallthru
    _
  // Predicated region
  $region70: #{_lambda_.5} parent=0 // pred_check
    _
  $region71: #{_lambda_.5} parent=0 // pred_check_branch
    %66 = sbr.rel (0) target = $region73
  $region72: #{_lambda_.5} parent=0 // pred_region
    _
  $region73: #{_lambda_.5} parent=0 // pred_fallthru
    _
  // Predicated region
  $region74: #{_lambda_.5} parent=0 // pred_check
    _
  $region75: #{_lambda_.5} parent=0 // pred_check_branch
    %68 = sbr.rel (0) target = $region77
  $region76: #{_lambda_.5} parent=0 // pred_region
    _
  $region77: #{_lambda_.5} parent=0 // pred_fallthru
    _
  // Predicated region
  $region78: #{_lambda_.5} parent=0 // pred_check
    _
  $region79: #{_lambda_.5} parent=0 // pred_check_branch
    %70 = sbr.rel (0) target = $region81
  $region80: #{_lambda_.5} parent=0 // pred_region
    _
  $region81: #{_lambda_.5} parent=0 // pred_fallthru
    _
  %v72 = vld [vmem:[%s0] sm:$0x3]
  %v73 = vld [vmem:[%s1] sm:$0x3]
  %v74 = vpack.c.bf16 %v73, %v73
  %v75 = vld [vmem:[%s2] sm:$0xf]
  %v76 = vld [vmem:[%s2 + $0x4] sm:$0xf]
  %v77 = vld [vmem:[%s2 + $0x8] sm:$0xf]
  %v78 = vld [vmem:[%s2 + $0xc] sm:$0xf]
  %v79 = vld [vmem:[%s2 + $0x10] sm:$0xf]
  %v80 = vld [vmem:[%s2 + $0x14] sm:$0xf]
  %v81 = vld [vmem:[%s2 + $0x18] sm:$0xf]
  %v82 = vld [vmem:[%s2 + $0x1c] sm:$0xf]
  %v83 = vld [vmem:[%s2 + $0x20] sm:$0xf]
  %v84 = vld [vmem:[%s2 + $0x24] sm:$0xf]
  %v85 = vld [vmem:[%s2 + $0x28] sm:$0xf]
  %v86 = vld [vmem:[%s2 + $0x2c] sm:$0xf]
  %v87 = vld [vmem:[%s2 + $0x30] sm:$0xf]
  %v88 = vld [vmem:[%s2 + $0x34] sm:$0xf]
  %v89 = vld [vmem:[%s2 + $0x38] sm:$0xf]
  %v90 = vld [vmem:[%s2 + $0x3c] sm:$0xf]
  %v91 = vld [vmem:[%s2 + $0x40] sm:$0xf]
  %v92 = vld [vmem:[%s2 + $0x44] sm:$0xf]
  %v93 = vld [vmem:[%s2 + $0x48] sm:$0xf]
  %v94 = vld [vmem:[%s2 + $0x4c] sm:$0xf]
  %v95 = vld [vmem:[%s2 + $0x50] sm:$0xf]
  %v96 = vld [vmem:[%s2 + $0x54] sm:$0xf]
  %v97 = vld [vmem:[%s2 + $0x58] sm:$0xf]
  %v98 = vld [vmem:[%s2 + $0x5c] sm:$0xf]
  %v99 = vld [vmem:[%s2 + $0x60] sm:$0xf]
  %v100 = vld [vmem:[%s3] sm:$0x1]
  %v102 = vlaneseq
  %v103 = vshrl.u32 %v102, 7
  %v104 = vsub.s32 0, %v103
  %v105 = vrot.slane %v100, %v104
  %v109 = vunpack.c.l.s4 1966171168
  %v110 = vunpack.c.0.s8 %v109
  %v111 = vlaneseq
  %v112 = vshrl.u32 %v111, 7
  %v113 = vsub.s32 %v110, %v112
  %v114 = vrot.slane %v72, %v113
  %v115 = vcombine.high %v114, %v114
  %v117 = vunpack.c.l.s4 1966171168
  %v118 = vunpack.c.0.s8 %v117
  %v119 = vlaneseq
  %v120 = vshrl.u32 %v119, 7
  %v121 = vsub.s32 %v118, %v120
  %v122 = vrot.slane %v114, %v121
  %v124 = vunpack.c.l.s4 1966171168
  %v125 = vunpack.c.0.s8 %v124
  %v126 = vlaneseq
  %v127 = vshrl.u32 %v126, 7
  %v128 = vsub.s32 %v125, %v127
  %v129 = vrot.slane %v115, %v128
  %v156 = vunpack.c.l.b16 %v75
  %v157 = vunpack.c.l.b16 %v76
  %v158 = vunpack.c.l.b16 %v77
  %v159 = vunpack.c.l.b16 %v78
  %v160 = vunpack.c.l.b16 %v79
  %v161 = vunpack.c.l.b16 %v80
  %v162 = vunpack.c.l.b16 %v81
  %v163 = vunpack.c.l.b16 %v82
  %v164 = vunpack.c.l.b16 %v83
  %v165 = vunpack.c.l.b16 %v84
  %v166 = vunpack.c.l.b16 %v85
  %v167 = vunpack.c.l.b16 %v86
  %v168 = vunpack.c.l.b16 %v87
  %v169 = vunpack.c.l.b16 %v88
  %v170 = vunpack.c.l.b16 %v89
  %v171 = vunpack.c.l.b16 %v90
  %v172 = vunpack.c.l.b16 %v91
  %v173 = vunpack.c.l.b16 %v92
  %v174 = vunpack.c.l.b16 %v93
  %v175 = vunpack.c.l.b16 %v94
  %v176 = vunpack.c.l.b16 %v95
  %v177 = vunpack.c.l.b16 %v96
  %v178 = vunpack.c.l.b16 %v97
  %v179 = vunpack.c.l.b16 %v98
  %v180 = vunpack.c.l.b16 %v99
  %v181 = vpack.c.b16 %v157, %v156
  %v182 = vpack.c.b16 %v159, %v158
  %v183 = vpack.c.b16 %v161, %v160
  %v184 = vpack.c.b16 %v163, %v162
  %v185 = vpack.c.b16 %v165, %v164
  %v186 = vpack.c.b16 %v167, %v166
  %v187 = vpack.c.b16 %v169, %v168
  %v188 = vpack.c.b16 %v171, %v170
  %v189 = vpack.c.b16 %v173, %v172
  %v190 = vpack.c.b16 %v175, %v174
  %v191 = vpack.c.b16 %v177, %v176
  %v192 = vpack.c.b16 %v179, %v178
  %v193 = vpack.c.b16 %v180, %v180
  %vm206 = vcmask 588800
  %v208 = vsel %vm206, %v129, 0
  %vm210 = vcmask 1043456
  %v212 = vsel %vm210, %v193, 0
  %214 = vmatprep.subr.bf16.mxu0 0
  %215 = vmatpush1.bf16.msra.mxu0 %v188
  %216 = vmatprep.subr.bf16.mxu0 0
  %217 = vmatpush1.bf16.msra.mxu0 %v187
  %218 = vmatprep.subr.bf16.mxu0 0
  %219 = vmatpush1.bf16.msra.mxu0 %v186
  %220 = vmatprep.subr.bf16.mxu0 0
  %221 = vmatpush1.bf16.msra.mxu0 %v185
  %222 = vmatprep.subr.bf16.mxu0 0
  %223 = vmatpush1.bf16.msra.mxu0 %v184
  %224 = vmatprep.subr.bf16.mxu0 0
  %225 = vmatpush1.bf16.msra.mxu0 %v183
  %226 = vmatprep.subr.bf16.mxu0 0
  %227 = vmatpush1.bf16.msra.mxu0 %v182
  %228 = vmatprep.subr.bf16.mxu0 0
  %229 = vmatpush1.bf16.msra.mxu0 %v181
  %230 = vmatprep.subr.bf16.mxu0 0
  %231 = vmatpush2.bf16.msra.mxu0 0
  %232 = vmatprep.subr.bf16.mxu0 0
  %233 = vmatpush2.bf16.msra.mxu0 0
  %234 = vmatprep.subr.bf16.mxu0 0
  %235 = vmatpush2.bf16.msra.mxu0 0
  %236 = vmatprep.subr.bf16.mxu0 0
  %237 = vmatpush2.bf16.msra.mxu0 %v212
  %238 = vmatprep.subr.bf16.mxu0 0
  %239 = vmatpush2.bf16.msra.mxu0 %v192
  %240 = vmatprep.subr.bf16.mxu0 0
  %241 = vmatpush2.bf16.msra.mxu0 %v191
  %242 = vmatprep.subr.bf16.mxu0 0
  %243 = vmatpush2.bf16.msra.mxu0 %v190
  %244 = vmatprep.subr.bf16.mxu0 0
  %245 = vmatpush2.bf16.msra.mxu0 %v189
  %246 = vmatprep.mubr.bf16.mxu0 %v208
  %247 = vmatmul.mubr.bf16.gmra.mxu0 %v122
  %v248 = vpop.f32.mrf.mxu0
  %v249 = vadd.f32 %v105, %v248
  %v250 = vpop.f32.mrf.mxu0
  %v251 = vpop.f32.mrf.mxu0
  %v252 = vpop.f32.mrf.mxu0
  %253 = vdwg.mxu0
  %vm254 = vcmask 254976
  %v255 = vsel %vm254, %v249, 0.0
  %256 = vadd.xlane.f32.xlu0 %v255
  %v257 = vpop.xlane.xlu0 %256
  %v258 = vrcp.pop 32.0
  %v259 = vmul.f32 %v257, %v258
  %v260 = vsub.f32 %v249, %v259
  %v261 = vmul.f32 %v260, %v260
  %v262 = vsel %vm254, %v261, 0.0
  %263 = vadd.xlane.f32.xlu0 %v262
  %v264 = vpop.xlane.xlu0 %263
  %v265 = vmul.f32 %v264, %v258
  %v266 = vadd.f32 %v265, 1e-05
  %v267 = vrsqrt.pop %v266
  %v268 = vmul.f32 %v260, %v267
  %v269 = vld [vmem:[%s4] sm:$0x1]
  %v271 = vlaneseq
  %v272 = vshrl.u32 %v271, 7
  %v273 = vsub.s32 0, %v272
  %v274 = vrot.slane %v269, %v273
  %v276 = vmul.f32 %v268, %v274
  %v277 = vld [vmem:[%s5] sm:$0x1]
  %v279 = vlaneseq
  %v280 = vshrl.u32 %v279, 7
  %v281 = vsub.s32 0, %v280
  %v282 = vrot.slane %v277, %v281
  %v284 = vadd.f32 %v276, %v282
  %v285 = vpack.c.bf16 %v284, %v284
  %v286 = vld [vmem:[%s6] sm:$0xf]
  %v287 = vld [vmem:[%s6 + $0x4] sm:$0xf]
  %v288 = vld [vmem:[%s6 + $0x8] sm:$0xf]
  %v289 = vld [vmem:[%s6 + $0xc] sm:$0xf]
  %v290 = vld [vmem:[%s7] sm:$0x3]
  %vm291 = vcmask 31744
  %v293 = vsel %vm291, %v74, 0
  %vm295 = vcmask 1041408
  %v297 = vsel %vm295, %v290, 0
  %299 = vmatprep.subr.bf16.mxu0 0
  %300 = vmatpush1.bf16.msra.mxu0 0
  %301 = vmatprep.subr.bf16.mxu0 0
  %302 = vmatpush1.bf16.msra.mxu0 0
  %303 = vmatprep.subr.bf16.mxu0 0
  %304 = vmatpush1.bf16.msra.mxu0 0
  %305 = vmatprep.subr.bf16.mxu0 0
  %306 = vmatpush1.bf16.msra.mxu0 0
  %307 = vmatprep.subr.bf16.mxu0 0
  %308 = vmatpush1.bf16.msra.mxu0 0
  %309 = vmatprep.subr.bf16.mxu0 0
  %310 = vmatpush1.bf16.msra.mxu0 0
  %311 = vmatprep.subr.bf16.mxu0 0
  %312 = vmatpush1.bf16.msra.mxu0 0
  %313 = vmatprep.subr.bf16.mxu0 0
  %314 = vmatpush1.bf16.msra.mxu0 %v297
  %315 = vmatprep.subr.bf16.mxu0 0
  %316 = vmatpush2.bf16.msra.mxu0 0
  %317 = vmatprep.subr.bf16.mxu0 0
  %318 = vmatpush2.bf16.msra.mxu0 0
  %319 = vmatprep.subr.bf16.mxu0 0
  %320 = vmatpush2.bf16.msra.mxu0 0
  %321 = vmatprep.subr.bf16.mxu0 0
  %322 = vmatpush2.bf16.msra.mxu0 0
  %323 = vmatprep.subr.bf16.mxu0 0
  %324 = vmatpush2.bf16.msra.mxu0 0
  %325 = vmatprep.subr.bf16.mxu0 0
  %326 = vmatpush2.bf16.msra.mxu0 0
  %327 = vmatprep.subr.bf16.mxu0 0
  %328 = vmatpush2.bf16.msra.mxu0 0
  %329 = vmatprep.subr.bf16.mxu0 0
  %330 = vmatpush2.bf16.msra.mxu0 0
  %331 = vmatprep.mubr.bf16.mxu0 0
  %332 = vmatmul.mubr.bf16.gmra.mxu0 %v293
  %v333 = vpop.f32.mrf.mxu0
  %v334 = vadd.f32 0.0, %v333
  %v335 = vpop.f32.mrf.mxu0
  %v336 = vpop.f32.mrf.mxu0
  %v337 = vpop.f32.mrf.mxu0
  %338 = vdwg.mxu0
  %v343 = vunpack.c.l.b16 %v286
  %v344 = vunpack.c.l.b16 %v287
  %v345 = vunpack.c.l.b16 %v288
  %v346 = vunpack.c.l.b16 %v289
  %v347 = vpack.c.b16 %v344, %v343
  %v348 = vpack.c.b16 %v346, %v345
  %vm351 = vcmask 261120
  %v353 = vsel %vm351, %v285, 0
  %355 = vmatprep.subr.bf16.mxu0 0
  %356 = vmatpush1.bf16.msra.mxu0 0
  %357 = vmatprep.subr.bf16.mxu0 0
  %358 = vmatpush1.bf16.msra.mxu0 0
  %359 = vmatprep.subr.bf16.mxu0 0
  %360 = vmatpush1.bf16.msra.mxu0 0
  %361 = vmatprep.subr.bf16.mxu0 0
  %362 = vmatpush1.bf16.msra.mxu0 0
  %363 = vmatprep.subr.bf16.mxu0 0
  %364 = vmatpush1.bf16.msra.mxu0 0
  %365 = vmatprep.subr.bf16.mxu0 0
  %366 = vmatpush1.bf16.msra.mxu0 0
  %367 = vmatprep.subr.bf16.mxu0 0
  %368 = vmatpush1.bf16.msra.mxu0 %v348
  %369 = vmatprep.subr.bf16.mxu0 0
  %370 = vmatpush1.bf16.msra.mxu0 %v347
  %371 = vmatprep.subr.bf16.mxu0 0
  %372 = vmatpush2.bf16.msra.mxu0 0
  %373 = vmatprep.subr.bf16.mxu0 0
  %374 = vmatpush2.bf16.msra.mxu0 0
  %375 = vmatprep.subr.bf16.mxu0 0
  %376 = vmatpush2.bf16.msra.mxu0 0
  %377 = vmatprep.subr.bf16.mxu0 0
  %378 = vmatpush2.bf16.msra.mxu0 0
  %379 = vmatprep.subr.bf16.mxu0 0
  %380 = vmatpush2.bf16.msra.mxu0 0
  %381 = vmatprep.subr.bf16.mxu0 0
  %382 = vmatpush2.bf16.msra.mxu0 0
  %383 = vmatprep.subr.bf16.mxu0 0
  %384 = vmatpush2.bf16.msra.mxu0 0
  %385 = vmatprep.subr.bf16.mxu0 0
  %386 = vmatpush2.bf16.msra.mxu0 0
  %387 = vmatprep.mubr.bf16.mxu0 0
  %388 = vmatmul.mubr.bf16.gmra.mxu0 %v353
  %v389 = vpop.f32.mrf.mxu0
  %v390 = vadd.f32 %v334, %v389
  %v391 = vpop.f32.mrf.mxu0
  %v392 = vpop.f32.mrf.mxu0
  %v393 = vpop.f32.mrf.mxu0
  %394 = vdwg.mxu0
  %v395 = vld [vmem:[%s8] sm:$0x1]
  %v397 = vlaneseq
  %v398 = vshrl.u32 %v397, 7
  %v399 = vsub.s32 0, %v398
  %v400 = vrot.slane %v395, %v399
  %v402 = vadd.f32 %v390, %v400
  %v403 = vmax.f32 %v402, 0.0
  %v404 = vpack.c.bf16 %v403, %v403
  %v405 = vld [vmem:[%s9] sm:$0xf]
  %v406 = vld [vmem:[%s9 + $0x4] sm:$0xf]
  %v407 = vld [vmem:[%s9 + $0x8] sm:$0xf]
  %v408 = vld [vmem:[%s9 + $0xc] sm:$0xf]
  %v409 = vld [vmem:[%s10] sm:$0x1]
  %v411 = vlaneseq
  %v412 = vshrl.u32 %v411, 7
  %v413 = vsub.s32 0, %v412
  %v414 = vrot.slane %v409, %v413
  %v420 = vunpack.c.l.b16 %v405
  %v421 = vunpack.c.l.b16 %v406
  %v422 = vunpack.c.l.b16 %v407
  %v423 = vunpack.c.l.b16 %v408
  %v424 = vpack.c.b16 %v421, %v420
  %v425 = vpack.c.b16 %v423, %v422
  %v429 = vsel %vm351, %v404, 0
  %431 = vmatprep.subr.bf16.mxu0 0
  %432 = vmatpush1.bf16.msra.mxu0 0
  %433 = vmatprep.subr.bf16.mxu0 0
  %434 = vmatpush1.bf16.msra.mxu0 0
  %435 = vmatprep.subr.bf16.mxu0 0
  %436 = vmatpush1.bf16.msra.mxu0 0
  %437 = vmatprep.subr.bf16.mxu0 0
  %438 = vmatpush1.bf16.msra.mxu0 0
  %439 = vmatprep.subr.bf16.mxu0 0
  %440 = vmatpush1.bf16.msra.mxu0 0
  %441 = vmatprep.subr.bf16.mxu0 0
  %442 = vmatpush1.bf16.msra.mxu0 0
  %443 = vmatprep.subr.bf16.mxu0 0
  %444 = vmatpush1.bf16.msra.mxu0 %v425
  %445 = vmatprep.subr.bf16.mxu0 0
  %446 = vmatpush1.bf16.msra.mxu0 %v424
  %447 = vmatprep.subr.bf16.mxu0 0
  %448 = vmatpush2.bf16.msra.mxu0 0
  %449 = vmatprep.subr.bf16.mxu0 0
  %450 = vmatpush2.bf16.msra.mxu0 0
  %451 = vmatprep.subr.bf16.mxu0 0
  %452 = vmatpush2.bf16.msra.mxu0 0
  %453 = vmatprep.subr.bf16.mxu0 0
  %454 = vmatpush2.bf16.msra.mxu0 0
  %455 = vmatprep.subr.bf16.mxu0 0
  %456 = vmatpush2.bf16.msra.mxu0 0
  %457 = vmatprep.subr.bf16.mxu0 0
  %458 = vmatpush2.bf16.msra.mxu0 0
  %459 = vmatprep.subr.bf16.mxu0 0
  %460 = vmatpush2.bf16.msra.mxu0 0
  %461 = vmatprep.subr.bf16.mxu0 0
  %462 = vmatpush2.bf16.msra.mxu0 0
  %463 = vmatprep.mubr.bf16.mxu0 0
  %464 = vmatmul.mubr.bf16.gmra.mxu0 %v429
  %v465 = vpop.f32.mrf.mxu0
  %v466 = vadd.f32 %v414, %v465
  %v467 = vpop.f32.mrf.mxu0
  %v468 = vpop.f32.mrf.mxu0
  %v469 = vpop.f32.mrf.mxu0
  %470 = vdwg.mxu0
  %v471 = vmax.f32 %v466, 0.0
  %v472 = vpack.c.bf16 %v471, %v471
  %v473 = vld [vmem:[%s11] sm:$0xf]
  %v474 = vld [vmem:[%s11 + $0x4] sm:$0xf]
  %v475 = vld [vmem:[%s11 + $0x8] sm:$0xf]
  %v476 = vld [vmem:[%s11 + $0xc] sm:$0xf]
  %v477 = vld [vmem:[#allocation2] sm:$0x1]
  %v479 = vlaneseq
  %v480 = vshrl.u32 %v479, 7
  %v481 = vsub.s32 0, %v480
  %v482 = vrot.slane %v477, %v481
  %v488 = vunpack.c.l.b16 %v473
  %v489 = vunpack.c.l.b16 %v474
  %v490 = vunpack.c.l.b16 %v475
  %v491 = vunpack.c.l.b16 %v476
  %v492 = vpack.c.b16 %v489, %v488
  %v493 = vpack.c.b16 %v491, %v490
  %v497 = vsel %vm351, %v472, 0
  %499 = vmatprep.subr.bf16.mxu0 0
  %500 = vmatpush1.bf16.msra.mxu0 0
  %501 = vmatprep.subr.bf16.mxu0 0
  %502 = vmatpush1.bf16.msra.mxu0 0
  %503 = vmatprep.subr.bf16.mxu0 0
  %504 = vmatpush1.bf16.msra.mxu0 0
  %505 = vmatprep.subr.bf16.mxu0 0
  %506 = vmatpush1.bf16.msra.mxu0 0
  %507 = vmatprep.subr.bf16.mxu0 0
  %508 = vmatpush1.bf16.msra.mxu0 0
  %509 = vmatprep.subr.bf16.mxu0 0
  %510 = vmatpush1.bf16.msra.mxu0 0
  %511 = vmatprep.subr.bf16.mxu0 0
  %512 = vmatpush1.bf16.msra.mxu0 %v493
  %513 = vmatprep.subr.bf16.mxu0 0
  %514 = vmatpush1.bf16.msra.mxu0 %v492
  %515 = vmatprep.subr.bf16.mxu0 0
  %516 = vmatpush2.bf16.msra.mxu0 0
  %517 = vmatprep.subr.bf16.mxu0 0
  %518 = vmatpush2.bf16.msra.mxu0 0
  %519 = vmatprep.subr.bf16.mxu0 0
  %520 = vmatpush2.bf16.msra.mxu0 0
  %521 = vmatprep.subr.bf16.mxu0 0
  %522 = vmatpush2.bf16.msra.mxu0 0
  %523 = vmatprep.subr.bf16.mxu0 0
  %524 = vmatpush2.bf16.msra.mxu0 0
  %525 = vmatprep.subr.bf16.mxu0 0
  %526 = vmatpush2.bf16.msra.mxu0 0
  %527 = vmatprep.subr.bf16.mxu0 0
  %528 = vmatpush2.bf16.msra.mxu0 0
  %529 = vmatprep.subr.bf16.mxu0 0
  %530 = vmatpush2.bf16.msra.mxu0 0
  %531 = vmatprep.mubr.bf16.mxu0 0
  %532 = vmatmul.mubr.bf16.gmra.mxu0 %v497
  %v533 = vpop.f32.mrf.mxu0
  %v534 = vadd.f32 %v482, %v533
  %v535 = vpop.f32.mrf.mxu0
  %v536 = vpop.f32.mrf.mxu0
  %v537 = vpop.f32.mrf.mxu0
  %538 = vdwg.mxu0
  %vm539 = vcmask 1024
  %540 = vst.msk [vmem:[%s20] sm:$0x3] %vm539, %v534
  %v541 = vld [vmem:[%s13] sm:$0xf]
  %v542 = vld [vmem:[%s13 + $0x4] sm:$0xf]
  %v543 = vld [vmem:[%s13 + $0x8] sm:$0xf]
  %v544 = vld [vmem:[%s13 + $0xc] sm:$0xf]
  %v545 = vld [vmem:[%s14] sm:$0x3]
  %v547 = vsel %vm295, %v545, 0
  %549 = vmatprep.subr.bf16.mxu0 0
  %550 = vmatpush1.bf16.msra.mxu0 0
  %551 = vmatprep.subr.bf16.mxu0 0
  %552 = vmatpush1.bf16.msra.mxu0 0
  %553 = vmatprep.subr.bf16.mxu0 0
  %554 = vmatpush1.bf16.msra.mxu0 0
  %555 = vmatprep.subr.bf16.mxu0 0
  %556 = vmatpush1.bf16.msra.mxu0 0
  %557 = vmatprep.subr.bf16.mxu0 0
  %558 = vmatpush1.bf16.msra.mxu0 0
  %559 = vmatprep.subr.bf16.mxu0 0
  %560 = vmatpush1.bf16.msra.mxu0 0
  %561 = vmatprep.subr.bf16.mxu0 0
  %562 = vmatpush1.bf16.msra.mxu0 0
  %563 = vmatprep.subr.bf16.mxu0 0
  %564 = vmatpush1.bf16.msra.mxu0 %v547
  %565 = vmatprep.subr.bf16.mxu0 0
  %566 = vmatpush2.bf16.msra.mxu0 0
  %567 = vmatprep.subr.bf16.mxu0 0
  %568 = vmatpush2.bf16.msra.mxu0 0
  %569 = vmatprep.subr.bf16.mxu0 0
  %570 = vmatpush2.bf16.msra.mxu0 0
  %571 = vmatprep.subr.bf16.mxu0 0
  %572 = vmatpush2.bf16.msra.mxu0 0
  %573 = vmatprep.subr.bf16.mxu0 0
  %574 = vmatpush2.bf16.msra.mxu0 0
  %575 = vmatprep.subr.bf16.mxu0 0
  %576 = vmatpush2.bf16.msra.mxu0 0
  %577 = vmatprep.subr.bf16.mxu0 0
  %578 = vmatpush2.bf16.msra.mxu0 0
  %579 = vmatprep.subr.bf16.mxu0 0
  %580 = vmatpush2.bf16.msra.mxu0 0
  %581 = vmatprep.mubr.bf16.mxu0 0
  %582 = vmatmul.mubr.bf16.gmra.mxu0 %v293
  %v583 = vpop.f32.mrf.mxu0
  %v584 = vadd.f32 0.0, %v583
  %v585 = vpop.f32.mrf.mxu0
  %v586 = vpop.f32.mrf.mxu0
  %v587 = vpop.f32.mrf.mxu0
  %588 = vdwg.mxu0
  %v593 = vunpack.c.l.b16 %v541
  %v594 = vunpack.c.l.b16 %v542
  %v595 = vunpack.c.l.b16 %v543
  %v596 = vunpack.c.l.b16 %v544
  %v597 = vpack.c.b16 %v594, %v593
  %v598 = vpack.c.b16 %v596, %v595
  %601 = vmatprep.subr.bf16.mxu0 0
  %602 = vmatpush1.bf16.msra.mxu0 0
  %603 = vmatprep.subr.bf16.mxu0 0
  %604 = vmatpush1.bf16.msra.mxu0 0
  %605 = vmatprep.subr.bf16.mxu0 0
  %606 = vmatpush1.bf16.msra.mxu0 0
  %607 = vmatprep.subr.bf16.mxu0 0
  %608 = vmatpush1.bf16.msra.mxu0 0
  %609 = vmatprep.subr.bf16.mxu0 0
  %610 = vmatpush1.bf16.msra.mxu0 0
  %611 = vmatprep.subr.bf16.mxu0 0
  %612 = vmatpush1.bf16.msra.mxu0 0
  %613 = vmatprep.subr.bf16.mxu0 0
  %614 = vmatpush1.bf16.msra.mxu0 %v598
  %615 = vmatprep.subr.bf16.mxu0 0
  %616 = vmatpush1.bf16.msra.mxu0 %v597
  %617 = vmatprep.subr.bf16.mxu0 0
  %618 = vmatpush2.bf16.msra.mxu0 0
  %619 = vmatprep.subr.bf16.mxu0 0
  %620 = vmatpush2.bf16.msra.mxu0 0
  %621 = vmatprep.subr.bf16.mxu0 0
  %622 = vmatpush2.bf16.msra.mxu0 0
  %623 = vmatprep.subr.bf16.mxu0 0
  %624 = vmatpush2.bf16.msra.mxu0 0
  %625 = vmatprep.subr.bf16.mxu0 0
  %626 = vmatpush2.bf16.msra.mxu0 0
  %627 = vmatprep.subr.bf16.mxu0 0
  %628 = vmatpush2.bf16.msra.mxu0 0
  %629 = vmatprep.subr.bf16.mxu0 0
  %630 = vmatpush2.bf16.msra.mxu0 0
  %631 = vmatprep.subr.bf16.mxu0 0
  %632 = vmatpush2.bf16.msra.mxu0 0
  %633 = vmatprep.mubr.bf16.mxu0 0
  %634 = vmatmul.mubr.bf16.gmra.mxu0 %v353
  %v635 = vpop.f32.mrf.mxu0
  %v636 = vadd.f32 %v584, %v635
  %v637 = vpop.f32.mrf.mxu0
  %v638 = vpop.f32.mrf.mxu0
  %v639 = vpop.f32.mrf.mxu0
  %640 = vdwg.mxu0
  %v641 = vld [vmem:[%s15] sm:$0x1]
  %v643 = vlaneseq
  %v644 = vshrl.u32 %v643, 7
  %v645 = vsub.s32 0, %v644
  %v646 = vrot.slane %v641, %v645
  %v648 = vadd.f32 %v636, %v646
  %v649 = vmax.f32 %v648, 0.0
  %v650 = vpack.c.bf16 %v649, %v649
  %v651 = vld [vmem:[%s16] sm:$0xf]
  %v652 = vld [vmem:[%s16 + $0x4] sm:$0xf]
  %v653 = vld [vmem:[%s16 + $0x8] sm:$0xf]
  %v654 = vld [vmem:[%s16 + $0xc] sm:$0xf]
  %v655 = vld [vmem:[%s17] sm:$0x1]
  %v657 = vlaneseq
  %v658 = vshrl.u32 %v657, 7
  %v659 = vsub.s32 0, %v658
  %v660 = vrot.slane %v655, %v659
  %v666 = vunpack.c.l.b16 %v651
  %v667 = vunpack.c.l.b16 %v652
  %v668 = vunpack.c.l.b16 %v653
  %v669 = vunpack.c.l.b16 %v654
  %v670 = vpack.c.b16 %v667, %v666
  %v671 = vpack.c.b16 %v669, %v668
  %v675 = vsel %vm351, %v650, 0
  %677 = vmatprep.subr.bf16.mxu0 0
  %678 = vmatpush1.bf16.msra.mxu0 0
  %679 = vmatprep.subr.bf16.mxu0 0
  %680 = vmatpush1.bf16.msra.mxu0 0
  %681 = vmatprep.subr.bf16.mxu0 0
  %682 = vmatpush1.bf16.msra.mxu0 0
  %683 = vmatprep.subr.bf16.mxu0 0
  %684 = vmatpush1.bf16.msra.mxu0 0
  %685 = vmatprep.subr.bf16.mxu0 0
  %686 = vmatpush1.bf16.msra.mxu0 0
  %687 = vmatprep.subr.bf16.mxu0 0
  %688 = vmatpush1.bf16.msra.mxu0 0
  %689 = vmatprep.subr.bf16.mxu0 0
  %690 = vmatpush1.bf16.msra.mxu0 %v671
  %691 = vmatprep.subr.bf16.mxu0 0
  %692 = vmatpush1.bf16.msra.mxu0 %v670
  %693 = vmatprep.subr.bf16.mxu0 0
  %694 = vmatpush2.bf16.msra.mxu0 0
  %695 = vmatprep.subr.bf16.mxu0 0
  %696 = vmatpush2.bf16.msra.mxu0 0
  %697 = vmatprep.subr.bf16.mxu0 0
  %698 = vmatpush2.bf16.msra.mxu0 0
  %699 = vmatprep.subr.bf16.mxu0 0
  %700 = vmatpush2.bf16.msra.mxu0 0
  %701 = vmatprep.subr.bf16.mxu0 0
  %702 = vmatpush2.bf16.msra.mxu0 0
  %703 = vmatprep.subr.bf16.mxu0 0
  %704 = vmatpush2.bf16.msra.mxu0 0
  %705 = vmatprep.subr.bf16.mxu0 0
  %706 = vmatpush2.bf16.msra.mxu0 0
  %707 = vmatprep.subr.bf16.mxu0 0
  %708 = vmatpush2.bf16.msra.mxu0 0
  %709 = vmatprep.mubr.bf16.mxu0 0
  %710 = vmatmul.mubr.bf16.gmra.mxu0 %v675
  %v711 = vpop.f32.mrf.mxu0
  %v712 = vadd.f32 %v660, %v711
  %v713 = vpop.f32.mrf.mxu0
  %v714 = vpop.f32.mrf.mxu0
  %v715 = vpop.f32.mrf.mxu0
  %716 = vdwg.mxu0
  %v717 = vmax.f32 %v712, 0.0
  %v718 = vpack.c.bf16 %v717, %v717
  %v719 = vld [vmem:[%s18] sm:$0xf]
  %v720 = vld [vmem:[%s18 + $0x4] sm:$0xf]
  %v721 = vld [vmem:[%s18 + $0x8] sm:$0xf]
  %v722 = vld [vmem:[%s18 + $0xc] sm:$0xf]
  %v723 = vld [vmem:[#allocation3] sm:$0x1]
  %v725 = vlaneseq
  %v726 = vshrl.u32 %v725, 7
  %v727 = vsub.s32 0, %v726
  %v728 = vrot.slane %v723, %v727
  %v734 = vunpack.c.l.b16 %v719
  %v735 = vunpack.c.l.b16 %v720
  %v736 = vunpack.c.l.b16 %v721
  %v737 = vunpack.c.l.b16 %v722
  %v738 = vpack.c.b16 %v735, %v734
  %v739 = vpack.c.b16 %v737, %v736
  %v743 = vsel %vm351, %v718, 0
  %745 = vmatprep.subr.bf16.mxu0 0
  %746 = vmatpush1.bf16.msra.mxu0 0
  %747 = vmatprep.subr.bf16.mxu0 0
  %748 = vmatpush1.bf16.msra.mxu0 0
  %749 = vmatprep.subr.bf16.mxu0 0
  %750 = vmatpush1.bf16.msra.mxu0 0
  %751 = vmatprep.subr.bf16.mxu0 0
  %752 = vmatpush1.bf16.msra.mxu0 0
  %753 = vmatprep.subr.bf16.mxu0 0
  %754 = vmatpush1.bf16.msra.mxu0 0
  %755 = vmatprep.subr.bf16.mxu0 0
  %756 = vmatpush1.bf16.msra.mxu0 0
  %757 = vmatprep.subr.bf16.mxu0 0
  %758 = vmatpush1.bf16.msra.mxu0 %v739
  %759 = vmatprep.subr.bf16.mxu0 0
  %760 = vmatpush1.bf16.msra.mxu0 %v738
  %761 = vmatprep.subr.bf16.mxu0 0
  %762 = vmatpush2.bf16.msra.mxu0 0
  %763 = vmatprep.subr.bf16.mxu0 0
  %764 = vmatpush2.bf16.msra.mxu0 0
  %765 = vmatprep.subr.bf16.mxu0 0
  %766 = vmatpush2.bf16.msra.mxu0 0
  %767 = vmatprep.subr.bf16.mxu0 0
  %768 = vmatpush2.bf16.msra.mxu0 0
  %769 = vmatprep.subr.bf16.mxu0 0
  %770 = vmatpush2.bf16.msra.mxu0 0
  %771 = vmatprep.subr.bf16.mxu0 0
  %772 = vmatpush2.bf16.msra.mxu0 0
  %773 = vmatprep.subr.bf16.mxu0 0
  %774 = vmatpush2.bf16.msra.mxu0 0
  %775 = vmatprep.subr.bf16.mxu0 0
  %776 = vmatpush2.bf16.msra.mxu0 0
  %777 = vmatprep.mubr.bf16.mxu0 0
  %778 = vmatmul.mubr.bf16.gmra.mxu0 %v743
  %v779 = vpop.f32.mrf.mxu0
  %v780 = vadd.f32 %v728, %v779
  %v781 = vpop.f32.mrf.mxu0
  %v782 = vpop.f32.mrf.mxu0
  %v783 = vpop.f32.mrf.mxu0
  %784 = vdwg.mxu0
  %785 = vst.msk [vmem:[%s21] sm:$0x3] %vm539, %v780
  // Predicated region
  $region82: #{_lambda_.5} parent=0 // pred_check
    _
  $region83: #{_lambda_.5} parent=0 // pred_check_branch
    %787 = sbr.rel (0) target = $region85
  $region84: #{_lambda_.5} parent=0 // pred_region
    _
  $region85: #{_lambda_.5} parent=0 // pred_fallthru
    _
  // Predicated region
  $region86: #{_lambda_.5} parent=0 // pred_check
    _
  $region87: #{_lambda_.5} parent=0 // pred_check_branch
    %789 = sbr.rel (0) target = $region89
  $region88: #{_lambda_.5} parent=0 // pred_region
    _
  $region89: #{_lambda_.5} parent=0 // pred_fallthru
    _
  // Predicated region
  $region90: #{_lambda_.5} parent=0 // pred_check
    _
  $region91: #{_lambda_.5} parent=0 // pred_check_branch
    %791 = sbr.rel (0) target = $region93
  $region92: #{_lambda_.5} parent=0 // pred_region
    _
  $region93: #{_lambda_.5} parent=0 // pred_fallthru
    _
  // Predicated region
  $region94: #{_lambda_.5} parent=0 // pred_check
    _
  $region95: #{_lambda_.5} parent=0 // pred_check_branch
    %793 = sbr.rel (0) target = $region97
  $region96: #{_lambda_.5} parent=0 // pred_region
    _
  $region97: #{_lambda_.5} parent=0 // pred_fallthru
    _

</llo_original>
